<compile_context>
chip_gen: v6e
topology: v6e:2x2x1
jax: 0.10.0
libtpu: 0.0.40
codegen_flags: <defaults>
</compile_context>

<pallas_src>
import numpy as np
import jax
import jax.numpy as jnp
from jax.experimental import pallas as pl
from jax.experimental.pallas import tpu as pltpu


# ---------------------------------------------------------------------------
# Pallas kernel: the whole network, fused (one batch tile per grid step).
# ---------------------------------------------------------------------------
def fused_audio_kernel(x_ref, m1_ref, b1_ref, m2_ref, b2_ref, m3_ref, b3_ref,
                       fcw_ref, fcb_ref, o_ref):
    """x_ref   : (TB, Hin*Win*Cin)           bf16, feature order (h, w, c)
       m*_ref  : (Hin*Win*Cin, 4*Ho*Wo*Cout) bf16, lowered conv+pool matrices
       b*_ref  : (1, Ho*Wo*Cout)             f32, bias tiled over (ho, wo)
       fcw_ref : (128, 128) bf16 ; fcb_ref : (1, 128) f32
       o_ref   : (TB, 128) f32
    """

    def conv_relu_pool(a, m_ref, b_ref):
        f = m_ref.shape[1] // 4
        # Single MXU matmul covering all 9 taps x 4 pool positions (bf16 in, f32 acc).
        z = jnp.dot(a, m_ref[...], preferred_element_type=jnp.float32)
        # 2x2 max-pool == elementwise max over the 4 lane-contiguous chunks.
        pooled = jnp.maximum(jnp.maximum(z[:, 0 * f:1 * f], z[:, 1 * f:2 * f]),
                             jnp.maximum(z[:, 2 * f:3 * f], z[:, 3 * f:4 * f]))
        # Bias is shared across pool positions and ReLU is monotone, so
        # relu(max_q(conv_q) + b) == maxpool(relu(conv + b)).
        y = jnp.maximum(pooled + b_ref[...], 0.0)
        return y.astype(jnp.bfloat16)

    a = x_ref[...]                                   # (TB, 64)  bf16
    a = conv_relu_pool(a, m1_ref, b1_ref)            # (TB, 512) = (TB, 4*4*32)
    a = conv_relu_pool(a, m2_ref, b2_ref)            # (TB, 256) = (TB, 2*2*64)
    a = conv_relu_pool(a, m3_ref, b3_ref)            # (TB, 128) = (TB, 1*1*128)
    y = jnp.dot(a, fcw_ref[...], preferred_element_type=jnp.float32) + fcb_ref[...]
    o_ref[...] = y.astype(o_ref.dtype)


# ---------------------------------------------------------------------------
# One-time host-side weight packing: lower conv3x3(pad=1) + 2x2 maxpool to a
# dense matrix acting on the (h, w, c)-flattened feature vector.
# ---------------------------------------------------------------------------
def _lower_conv_pool_matrix(w_np, Hin, Win):
    """w_np: (3, 3, Cin, Cout).  Returns M: (Hin*Win*Cin, 4*Ho*Wo*Cout) f32 with
    column index = ((q*Ho + ho)*Wo + wo)*Cout + cout, q = 2*dy + dx (pool offset)."""
    KH, KW, Cin, Cout = w_np.shape
    Ho, Wo = Hin // 2, Win // 2
    grids = np.meshgrid(np.arange(2), np.arange(2), np.arange(Ho), np.arange(Wo),
                        np.arange(KH), np.arange(KW), indexing="ij")
    dy, dx, ho, wo, ky, kx = [g.ravel() for g in grids]
    hin = 2 * ho + dy + ky - 1          # padding = 1
    win = 2 * wo + dx + kx - 1
    valid = (hin >= 0) & (hin < Hin) & (win >= 0) & (win < Win)
    dy, dx, ho, wo, ky, kx, hin, win = [a[valid] for a in
                                        (dy, dx, ho, wo, ky, kx, hin, win)]
    q = 2 * dy + dx
    row_base = (hin * Win + win) * Cin                      # (E,)
    col_base = ((q * Ho + ho) * Wo + wo) * Cout             # (E,)
    E = row_base.shape[0]
    rows = np.broadcast_to(row_base[:, None, None] + np.arange(Cin)[None, :, None],
                           (E, Cin, Cout)).ravel()
    cols = np.broadcast_to(col_base[:, None, None] + np.arange(Cout)[None, None, :],
                           (E, Cin, Cout)).ravel()
    vals = w_np[ky, kx].reshape(-1)                         # (E, Cin, Cout) -> flat
    M = np.zeros((Hin * Win * Cin, 4 * Ho * Wo * Cout), np.float32)
    M[rows, cols] = vals
    return M


def pack_params(params, matmul_dtype=jnp.bfloat16):
    """Pre-lower the conv layers and cast matmul operands to bf16 (f32 bias)."""
    def conv_pack(wkey, bkey, Hin, Win):
        w = np.asarray(params[wkey], np.float32)
        b = np.asarray(params[bkey], np.float32)
        Ho, Wo = Hin // 2, Win // 2
        Cout = w.shape[-1]
        M = _lower_conv_pool_matrix(w, Hin, Win)
        bflat = np.tile(b, Ho * Wo).reshape(1, Ho * Wo * Cout)  # index (ho,wo,c)
        return jnp.asarray(M, matmul_dtype), jnp.asarray(bflat, jnp.float32)

    m1, b1 = conv_pack("conv1_w", "conv1_b", 8, 8)   # (64, 2048), (1, 512)
    m2, b2 = conv_pack("conv2_w", "conv2_b", 4, 4)   # (512, 1024), (1, 256)
    m3, b3 = conv_pack("conv3_w", "conv3_b", 2, 2)   # (256, 512), (1, 128)
    fcw = jnp.asarray(params["fc_w"], matmul_dtype)                  # (128, 128)
    fcb = jnp.asarray(params["fc_b"], jnp.float32).reshape(1, -1)    # (1, 128)
    return dict(m1=m1, b1=b1, m2=m2, b2=b2, m3=m3, b3=b3, fcw=fcw, fcb=fcb)


# ---------------------------------------------------------------------------
# Forward pass
# ---------------------------------------------------------------------------
def _round_up(n, m):
    return pl.cdiv(n, m) * m


def audio_module_forward(packed, x_nchw, *, max_batch_tile=256):
    """x_nchw: (B, 1, 8, 8) float32 (PyTorch NCHW).  Returns (B, 128) float32."""
    B = x_nchw.shape[0]
    # NCHW -> NHWC -> (B, H*W*C) with feature order (h, w, c).
    x = jnp.transpose(x_nchw, (0, 2, 3, 1)).reshape(B, -1).astype(jnp.bfloat16)
    feat = x.shape[1]                                    # 64

    TB = min(max_batch_tile, _round_up(B, 8))            # batch tile, multiple of 8
    Bp = _round_up(B, TB)
    if Bp != B:
        x = jnp.pad(x, ((0, Bp - B), (0, 0)))

    out = pl.pallas_call(
        fused_audio_kernel,
        out_shape=jax.ShapeDtypeStruct((Bp, 128), jnp.float32),
        grid=(Bp // TB,),
        in_specs=[
            pl.BlockSpec((TB, feat), lambda i: (i, 0)),            # x: tiled on batch
            pl.BlockSpec(packed["m1"].shape, lambda i: (0, 0)),    # resident weights
            pl.BlockSpec(packed["b1"].shape, lambda i: (0, 0)),
            pl.BlockSpec(packed["m2"].shape, lambda i: (0, 0)),
            pl.BlockSpec(packed["b2"].shape, lambda i: (0, 0)),
            pl.BlockSpec(packed["m3"].shape, lambda i: (0, 0)),
            pl.BlockSpec(packed["b3"].shape, lambda i: (0, 0)),
            pl.BlockSpec(packed["fcw"].shape, lambda i: (0, 0)),
            pl.BlockSpec(packed["fcb"].shape, lambda i: (0, 0)),
        ],
        out_specs=pl.BlockSpec((TB, 128), lambda i: (i, 0)),       # lane-dense (128)
        compiler_params=pltpu.CompilerParams(
            dimension_semantics=("parallel",),        # pipeline + v7x dual-core
            vmem_limit_bytes=32 * 1024 * 1024,        # explicit, safe on v5e/v6e/v7x
        ),
    )(x, packed["m1"], packed["b1"], packed["m2"], packed["b2"],
      packed["m3"], packed["b3"], packed["fcw"], packed["fcb"])
    return out[:B]


# ---------------------------------------------------------------------------
# Parameters (HWIO conv weights; fc weight stored pre-transposed as (in, out))
# ---------------------------------------------------------------------------
def init_params(key):
    ks = jax.random.split(key, 8)
    scale = 0.1

    def conv_w(k, cin, cout):
        return scale * jax.random.normal(k, (3, 3, cin, cout), jnp.float32)

    return {
        "conv1_w": conv_w(ks[0], 1, 32),
        "conv1_b": scale * jax.random.normal(ks[1], (32,), jnp.float32),
        "conv2_w": conv_w(ks[2], 32, 64),
        "conv2_b": scale * jax.random.normal(ks[3], (64,), jnp.float32),
        "conv3_w": conv_w(ks[4], 64, 128),
        "conv3_b": scale * jax.random.normal(ks[5], (128,), jnp.float32),
        "fc_w": scale * jax.random.normal(ks[6], (128, 128), jnp.float32),
        "fc_b": scale * jax.random.normal(ks[7], (128,), jnp.float32),
    }


# ---------------------------------------------------------------------------
# Pure-JAX reference (for a sanity check against the fused kernel)
# ---------------------------------------------------------------------------
def _reference_forward(params, x_nchw):
    x = jnp.transpose(x_nchw, (0, 2, 3, 1))

    def conv_relu_pool(x, w, b):
        y = jax.lax.conv_general_dilated(
            x, w, window_strides=(1, 1), padding="SAME",
            dimension_numbers=("NHWC", "HWIO", "NHWC"))
        y = jnp.maximum(y + b, 0.0)
        return jax.lax.reduce_window(y, -jnp.inf, jax.lax.max,
                                     (1, 2, 2, 1), (1, 2, 2, 1), "VALID")

    x = conv_relu_pool(x, params["conv1_w"], params["conv1_b"])
    x = conv_relu_pool(x, params["conv2_w"], params["conv2_b"])
    x = conv_relu_pool(x, params["conv3_w"], params["conv3_b"])
    x = x.reshape(x.shape[0], -1)
    return x @ params["fc_w"] + params["fc_b"]


if __name__ == "__main__":
    key = jax.random.PRNGKey(0)
    k_in, k_par = jax.random.split(key)

    # fc expects 128*1*1 features => input spatial must be 8x8 (8 -> 4 -> 2 -> 1).
    x = jax.random.normal(k_in, (2, 1, 8, 8), jnp.float32)   # NCHW like PyTorch
    params = init_params(k_par)
    packed = pack_params(params)                              # one-time weight packing

    fwd = jax.jit(audio_module_forward)
    out = jax.block_until_ready(fwd(packed, x))
    assert out.shape == (2, 128), out.shape

    # Sanity check vs plain-JAX reference (bf16 matmuls, f32 accumulation).
    ref = jax.block_until_ready(_reference_forward(params, x))
    err = float(jnp.max(jnp.abs(out - ref)))
    assert err < 0.2, f"max abs err {err}"

    print("KERNEL_OK")
</pallas_src>

<mosaic_0001>
module attributes {stable_mosaic.version = 11 : i64} {
  func.func @fused_audio_kernel(%arg0: i32, %arg1: memref<8x64xbf16, #tpu.memory_space<vmem>>, %arg2: memref<64x2048xbf16, #tpu.memory_space<vmem>>, %arg3: memref<1x512xf32, #tpu.memory_space<vmem>>, %arg4: memref<512x1024xbf16, #tpu.memory_space<vmem>>, %arg5: memref<1x256xf32, #tpu.memory_space<vmem>>, %arg6: memref<256x512xbf16, #tpu.memory_space<vmem>>, %arg7: memref<1x128xf32, #tpu.memory_space<vmem>>, %arg8: memref<128x128xbf16, #tpu.memory_space<vmem>>, %arg9: memref<1x128xf32, #tpu.memory_space<vmem>>, %arg10: memref<8x128xf32, #tpu.memory_space<vmem>>) attributes {dimension_semantics = [#tpu.dimension_semantics<parallel>], iteration_bounds = array<i64: 1>, scalar_prefetch = 0 : i64, scratch_operands = 0 : i64, tpu.core_type = #tpu.core_type<tc>, window_params = [{transform_indices = @transform_0, window_bounds = array<i64: 8, 64>}, {pipeline_mode = #tpu.pipeline_mode<synchronous>, transform_indices = @transform_1, window_bounds = array<i64: 64, 2048>}, {pipeline_mode = #tpu.pipeline_mode<synchronous>, transform_indices = @transform_2, window_bounds = array<i64: 1, 512>}, {pipeline_mode = #tpu.pipeline_mode<synchronous>, transform_indices = @transform_3, window_bounds = array<i64: 512, 1024>}, {pipeline_mode = #tpu.pipeline_mode<synchronous>, transform_indices = @transform_4, window_bounds = array<i64: 1, 256>}, {pipeline_mode = #tpu.pipeline_mode<synchronous>, transform_indices = @transform_5, window_bounds = array<i64: 256, 512>}, {pipeline_mode = #tpu.pipeline_mode<synchronous>, transform_indices = @transform_6, window_bounds = array<i64: 1, 128>}, {pipeline_mode = #tpu.pipeline_mode<synchronous>, transform_indices = @transform_7, window_bounds = array<i64: 128, 128>}, {pipeline_mode = #tpu.pipeline_mode<synchronous>, transform_indices = @transform_8, window_bounds = array<i64: 1, 128>}, {transform_indices = @transform_9, window_bounds = array<i64: 8, 128>}]} {
    %c0 = arith.constant 0 : index
    %c0_0 = arith.constant 0 : index
    %0 = vector.load %arg1[%c0, %c0_0] : memref<8x64xbf16, #tpu.memory_space<vmem>>, vector<8x64xbf16>
    %c0_1 = arith.constant 0 : index
    %c0_2 = arith.constant 0 : index
    %1 = vector.load %arg2[%c0_1, %c0_2] : memref<64x2048xbf16, #tpu.memory_space<vmem>>, vector<64x2048xbf16>
    %cst = arith.constant dense<0.000000e+00> : vector<8x2048xf32>
    %2 = tpu.matmul %0, %1, %cst {dimension_numbers = #tpu.dot_dimension_numbers<[1], [0], [0], [1], [0, 0, 1, 1], [], []>} : vector<8x64xbf16>, vector<64x2048xbf16>, vector<8x2048xf32> -> vector<8x2048xf32>
    %3 = vector.extract_strided_slice %2 {offsets = [0, 0], sizes = [8, 512], strides = [1, 1]} : vector<8x2048xf32> to vector<8x512xf32>
    %4 = vector.extract_strided_slice %2 {offsets = [0, 512], sizes = [8, 512], strides = [1, 1]} : vector<8x2048xf32> to vector<8x512xf32>
    %5 = arith.maximumf %3, %4 : vector<8x512xf32>
    %6 = vector.extract_strided_slice %2 {offsets = [0, 1024], sizes = [8, 512], strides = [1, 1]} : vector<8x2048xf32> to vector<8x512xf32>
    %7 = vector.extract_strided_slice %2 {offsets = [0, 1536], sizes = [8, 512], strides = [1, 1]} : vector<8x2048xf32> to vector<8x512xf32>
    %8 = arith.maximumf %6, %7 : vector<8x512xf32>
    %9 = arith.maximumf %5, %8 : vector<8x512xf32>
    %c0_3 = arith.constant 0 : index
    %c0_4 = arith.constant 0 : index
    %10 = vector.load %arg3[%c0_3, %c0_4] : memref<1x512xf32, #tpu.memory_space<vmem>>, vector<1x512xf32>
    %11 = vector.broadcast %10 : vector<1x512xf32> to vector<8x512xf32>
    %12 = arith.addf %9, %11 : vector<8x512xf32>
    %cst_5 = arith.constant 0.000000e+00 : f32
    %13 = vector.broadcast %cst_5 : f32 to vector<8x512xf32>
    %14 = arith.maximumf %12, %13 : vector<8x512xf32>
    %15 = arith.truncf %14 : vector<8x512xf32> to vector<8x512xbf16>
    %c0_6 = arith.constant 0 : index
    %c0_7 = arith.constant 0 : index
    %16 = vector.load %arg4[%c0_6, %c0_7] : memref<512x1024xbf16, #tpu.memory_space<vmem>>, vector<512x1024xbf16>
    %cst_8 = arith.constant dense<0.000000e+00> : vector<8x1024xf32>
    %17 = tpu.matmul %15, %16, %cst_8 {dimension_numbers = #tpu.dot_dimension_numbers<[1], [0], [0], [1], [0, 0, 1, 1], [], []>} : vector<8x512xbf16>, vector<512x1024xbf16>, vector<8x1024xf32> -> vector<8x1024xf32>
    %18 = vector.extract_strided_slice %17 {offsets = [0, 0], sizes = [8, 256], strides = [1, 1]} : vector<8x1024xf32> to vector<8x256xf32>
    %19 = vector.extract_strided_slice %17 {offsets = [0, 256], sizes = [8, 256], strides = [1, 1]} : vector<8x1024xf32> to vector<8x256xf32>
    %20 = arith.maximumf %18, %19 : vector<8x256xf32>
    %21 = vector.extract_strided_slice %17 {offsets = [0, 512], sizes = [8, 256], strides = [1, 1]} : vector<8x1024xf32> to vector<8x256xf32>
    %22 = vector.extract_strided_slice %17 {offsets = [0, 768], sizes = [8, 256], strides = [1, 1]} : vector<8x1024xf32> to vector<8x256xf32>
    %23 = arith.maximumf %21, %22 : vector<8x256xf32>
    %24 = arith.maximumf %20, %23 : vector<8x256xf32>
    %c0_9 = arith.constant 0 : index
    %c0_10 = arith.constant 0 : index
    %25 = vector.load %arg5[%c0_9, %c0_10] : memref<1x256xf32, #tpu.memory_space<vmem>>, vector<1x256xf32>
    %26 = vector.broadcast %25 : vector<1x256xf32> to vector<8x256xf32>
    %27 = arith.addf %24, %26 : vector<8x256xf32>
    %cst_11 = arith.constant 0.000000e+00 : f32
    %28 = vector.broadcast %cst_11 : f32 to vector<8x256xf32>
    %29 = arith.maximumf %27, %28 : vector<8x256xf32>
    %30 = arith.truncf %29 : vector<8x256xf32> to vector<8x256xbf16>
    %c0_12 = arith.constant 0 : index
    %c0_13 = arith.constant 0 : index
    %31 = vector.load %arg6[%c0_12, %c0_13] : memref<256x512xbf16, #tpu.memory_space<vmem>>, vector<256x512xbf16>
    %cst_14 = arith.constant dense<0.000000e+00> : vector<8x512xf32>
    %32 = tpu.matmul %30, %31, %cst_14 {dimension_numbers = #tpu.dot_dimension_numbers<[1], [0], [0], [1], [0, 0, 1, 1], [], []>} : vector<8x256xbf16>, vector<256x512xbf16>, vector<8x512xf32> -> vector<8x512xf32>
    %33 = vector.extract_strided_slice %32 {offsets = [0, 0], sizes = [8, 128], strides = [1, 1]} : vector<8x512xf32> to vector<8x128xf32>
    %34 = vector.extract_strided_slice %32 {offsets = [0, 128], sizes = [8, 128], strides = [1, 1]} : vector<8x512xf32> to vector<8x128xf32>
    %35 = arith.maximumf %33, %34 : vector<8x128xf32>
    %36 = vector.extract_strided_slice %32 {offsets = [0, 256], sizes = [8, 128], strides = [1, 1]} : vector<8x512xf32> to vector<8x128xf32>
    %37 = vector.extract_strided_slice %32 {offsets = [0, 384], sizes = [8, 128], strides = [1, 1]} : vector<8x512xf32> to vector<8x128xf32>
    %38 = arith.maximumf %36, %37 : vector<8x128xf32>
    %39 = arith.maximumf %35, %38 : vector<8x128xf32>
    %c0_15 = arith.constant 0 : index
    %c0_16 = arith.constant 0 : index
    %40 = vector.load %arg7[%c0_15, %c0_16] : memref<1x128xf32, #tpu.memory_space<vmem>>, vector<1x128xf32>
    %41 = vector.broadcast %40 : vector<1x128xf32> to vector<8x128xf32>
    %42 = arith.addf %39, %41 : vector<8x128xf32>
    %cst_17 = arith.constant 0.000000e+00 : f32
    %43 = vector.broadcast %cst_17 : f32 to vector<8x128xf32>
    %44 = arith.maximumf %42, %43 : vector<8x128xf32>
    %45 = arith.truncf %44 : vector<8x128xf32> to vector<8x128xbf16>
    %c0_18 = arith.constant 0 : index
    %c0_19 = arith.constant 0 : index
    %46 = vector.load %arg8[%c0_18, %c0_19] : memref<128x128xbf16, #tpu.memory_space<vmem>>, vector<128x128xbf16>
    %cst_20 = arith.constant dense<0.000000e+00> : vector<8x128xf32>
    %47 = tpu.matmul %45, %46, %cst_20 {dimension_numbers = #tpu.dot_dimension_numbers<[1], [0], [0], [1], [0, 0, 1, 1], [], []>} : vector<8x128xbf16>, vector<128x128xbf16>, vector<8x128xf32> -> vector<8x128xf32>
    %c0_21 = arith.constant 0 : index
    %c0_22 = arith.constant 0 : index
    %48 = vector.load %arg9[%c0_21, %c0_22] : memref<1x128xf32, #tpu.memory_space<vmem>>, vector<1x128xf32>
    %49 = vector.broadcast %48 : vector<1x128xf32> to vector<8x128xf32>
    %50 = arith.addf %47, %49 : vector<8x128xf32>
    %c0_23 = arith.constant 0 : index
    %c0_24 = arith.constant 0 : index
    %51 = vector.load %arg10[%c0_23, %c0_24] : memref<8x128xf32, #tpu.memory_space<vmem>>, vector<8x128xf32>
    tpu.vector_store %arg10[%c0_23, %c0_24], %50 {strides = array<i32>} : memref<8x128xf32, #tpu.memory_space<vmem>>, vector<8x128xf32>,
    return
  }
  func.func @transform_0(%arg0: i32) -> (i32, i32) {
    %c0_i32 = arith.constant 0 : i32
    %c0_i32_0 = arith.constant 0 : i32
    return %arg0, %c0_i32 : i32, i32
  }
  func.func @transform_1(%arg0: i32) -> (i32, i32) {
    %c0_i32 = arith.constant 0 : i32
    %c0_i32_0 = arith.constant 0 : i32
    %c0_i32_1 = arith.constant 0 : i32
    return %c0_i32, %c0_i32_0 : i32, i32
  }
  func.func @transform_2(%arg0: i32) -> (i32, i32) {
    %c0_i32 = arith.constant 0 : i32
    %c0_i32_0 = arith.constant 0 : i32
    %c0_i32_1 = arith.constant 0 : i32
    return %c0_i32, %c0_i32_0 : i32, i32
  }
  func.func @transform_3(%arg0: i32) -> (i32, i32) {
    %c0_i32 = arith.constant 0 : i32
    %c0_i32_0 = arith.constant 0 : i32
    %c0_i32_1 = arith.constant 0 : i32
    return %c0_i32, %c0_i32_0 : i32, i32
  }
  func.func @transform_4(%arg0: i32) -> (i32, i32) {
    %c0_i32 = arith.constant 0 : i32
    %c0_i32_0 = arith.constant 0 : i32
    %c0_i32_1 = arith.constant 0 : i32
    return %c0_i32, %c0_i32_0 : i32, i32
  }
  func.func @transform_5(%arg0: i32) -> (i32, i32) {
    %c0_i32 = arith.constant 0 : i32
    %c0_i32_0 = arith.constant 0 : i32
    %c0_i32_1 = arith.constant 0 : i32
    return %c0_i32, %c0_i32_0 : i32, i32
  }
  func.func @transform_6(%arg0: i32) -> (i32, i32) {
    %c0_i32 = arith.constant 0 : i32
    %c0_i32_0 = arith.constant 0 : i32
    %c0_i32_1 = arith.constant 0 : i32
    return %c0_i32, %c0_i32_0 : i32, i32
  }
  func.func @transform_7(%arg0: i32) -> (i32, i32) {
    %c0_i32 = arith.constant 0 : i32
    %c0_i32_0 = arith.constant 0 : i32
    %c0_i32_1 = arith.constant 0 : i32
    return %c0_i32, %c0_i32_0 : i32, i32
  }
  func.func @transform_8(%arg0: i32) -> (i32, i32) {
    %c0_i32 = arith.constant 0 : i32
    %c0_i32_0 = arith.constant 0 : i32
    %c0_i32_1 = arith.constant 0 : i32
    return %c0_i32, %c0_i32_0 : i32, i32
  }
  func.func @transform_9(%arg0: i32) -> (i32, i32) {
    %c0_i32 = arith.constant 0 : i32
    %c0_i32_0 = arith.constant 0 : i32
    return %arg0, %c0_i32 : i32, i32
  }
}

</mosaic_0001>

<llo_original>
// kernel: audio_module_forward.1
$region0: #{audio_module_forward.1}
  #allocation0 [shape = 'u32[]', space=smem, size = 0x4, offset = 0x4, fixed_abs, tag = 'smem constant byte address 0x4 - core index']
  #allocation1 [shape = 'u32[144,128]{1,0:T(1,128)}', space=vmem, size = 0x12000, scoped, tag = 'internal scratch']
  %s0 = inlined_call_operand.vmem [shape: bf16[8,64], index: 0, kind: input, shape index: {}]
  %s1 = inlined_call_operand.hbm [shape: bf16[64,2048], index: 1, kind: input, shape index: {}]
  %s2 = inlined_call_operand.vmem [shape: f32[1,512], index: 2, kind: input, shape index: {}]
  %s3 = inlined_call_operand.hbm [shape: bf16[512,1024], index: 3, kind: input, shape index: {}]
  %s4 = inlined_call_operand.vmem [shape: f32[1,256], index: 4, kind: input, shape index: {}]
  %s5 = inlined_call_operand.hbm [shape: bf16[256,512], index: 5, kind: input, shape index: {}]
  %s6 = inlined_call_operand.vmem [shape: f32[1,128], index: 6, kind: input, shape index: {}]
  %s7 = inlined_call_operand.hbm [shape: bf16[128,128], index: 7, kind: input, shape index: {}]
  %s8 = inlined_call_operand.vmem [shape: f32[1,128], index: 8, kind: input, shape index: {}]
  %s9 = inlined_call_operand.vmem [shape: f32[8,128], index: 9, kind: output, shape index: {}]
  %s10 = sld [smem:[#allocation0]]
  $region62: #{audio_module_forward.1} parent=0
    _
  %s12 = ssub.s32 1, %s10
  %s13 = scalar_select 0, %s12, %s10
  $region1: #{audio_module_forward.1} parent=0
    #allocation2 [shape = 'u8[262144]{0}', space=vmem, size = 0x40000, scoped, tag = 'input window, operand 1, single buffered']
    #allocation3 [shape = 's32[1]{0}', space=sflag, size = 0x4, scoped, tag = 'scoped memory for audio_module_forward.1']
    #allocation4 [shape = 'u8[1048576]{0}', space=vmem, size = 0x100000, scoped, tag = 'input window, operand 3, single buffered']
    #allocation5 [shape = 's32[1]{0}', space=sflag, size = 0x4, scoped, tag = 'scoped memory for audio_module_forward.1']
    #allocation6 [shape = 'u8[262144]{0}', space=vmem, size = 0x40000, scoped, tag = 'input window, operand 5, single buffered']
    #allocation7 [shape = 'u8[32768]{0}', space=vmem, size = 0x8000, scoped, tag = 'input window, operand 7, single buffered']
    #allocation8 [shape = 's32[1]{0}', space=sflag, size = 0x4, scoped, tag = 'scoped memory for audio_module_forward.1']
    %14 = vsyncpa [#allocation3], 0
    %15 = vsyncpa [#allocation5], 0
    %16 = vsyncpa [#allocation8], 0
    // Predicated region
    $region2: #{audio_module_forward.1} parent=1 // pred_check
      _
    $region3: #{audio_module_forward.1} parent=1 // pred_check_branch
      %18 = sbr.rel (0) target = $region5
    $region4: #{audio_module_forward.1} parent=1 // pred_region
      _
    $region5: #{audio_module_forward.1} parent=1 // pred_fallthru
      _
    // Predicated region
    $region6: #{audio_module_forward.1} parent=1 // pred_check
      _
    $region7: #{audio_module_forward.1} parent=1 // pred_check_branch
      %20 = sbr.rel (0) target = $region9
    $region8: #{audio_module_forward.1} parent=1 // pred_region
      %s22 = ssub.s32 8192, 8192
      %23 = vsyncadd [#allocation3], %s22
      %s24 = sshll.u32 [#allocation2], 4
      %s25 = int_to_ptr.vmem [resolvable:$true] %s24
      %30 = dma.hbm_to_vmem [thread:$0]  %s1, 8192, %s25, [#allocation3], 1024, 1024, 64
    $region9: #{audio_module_forward.1} parent=1 // pred_fallthru
      _
    // Predicated region
    $region10: #{audio_module_forward.1} parent=1 // pred_check
      _
    $region11: #{audio_module_forward.1} parent=1 // pred_check_branch
      %32 = sbr.rel (0) target = $region13
    $region12: #{audio_module_forward.1} parent=1 // pred_region
      _
    $region13: #{audio_module_forward.1} parent=1 // pred_fallthru
      _
    // Predicated region
    $region14: #{audio_module_forward.1} parent=1 // pred_check
      _
    $region15: #{audio_module_forward.1} parent=1 // pred_check_branch
      %34 = sbr.rel (0) target = $region17
    $region16: #{audio_module_forward.1} parent=1 // pred_region
      %s36 = ssub.s32 32768, 32768
      %37 = vsyncadd [#allocation5], %s36
      %s38 = sshll.u32 [#allocation4], 4
      %s39 = int_to_ptr.vmem [resolvable:$true] %s38
      %44 = dma.hbm_to_vmem [thread:$0]  %s3, 32768, %s39, [#allocation5], 512, 512, 32
    $region17: #{audio_module_forward.1} parent=1 // pred_fallthru
      _
    // Predicated region
    $region18: #{audio_module_forward.1} parent=1 // pred_check
      _
    $region19: #{audio_module_forward.1} parent=1 // pred_check_branch
      %46 = sbr.rel (0) target = $region21
    $region20: #{audio_module_forward.1} parent=1 // pred_region
      _
    $region21: #{audio_module_forward.1} parent=1 // pred_fallthru
      _
    // Predicated region
    $region22: #{audio_module_forward.1} parent=1 // pred_check
      _
    $region23: #{audio_module_forward.1} parent=1 // pred_check_branch
      %48 = sbr.rel (0) target = $region25
    $region24: #{audio_module_forward.1} parent=1 // pred_region
      %s50 = ssub.s32 8192, 8192
      %51 = vsyncadd [#allocation5], %s50
      %s52 = sshll.u32 [#allocation6], 4
      %s53 = int_to_ptr.vmem [resolvable:$true] %s52
      %58 = dma.hbm_to_vmem [thread:$0]  %s5, 8192, %s53, [#allocation5], 256, 256, 16
    $region25: #{audio_module_forward.1} parent=1 // pred_fallthru
      _
    // Predicated region
    $region26: #{audio_module_forward.1} parent=1 // pred_check
      _
    $region27: #{audio_module_forward.1} parent=1 // pred_check_branch
      %60 = sbr.rel (0) target = $region29
    $region28: #{audio_module_forward.1} parent=1 // pred_region
      _
    $region29: #{audio_module_forward.1} parent=1 // pred_fallthru
      _
    // Predicated region
    $region30: #{audio_module_forward.1} parent=1 // pred_check
      _
    $region31: #{audio_module_forward.1} parent=1 // pred_check_branch
      %62 = sbr.rel (0) target = $region33
    $region32: #{audio_module_forward.1} parent=1 // pred_region
      %s64 = ssub.s32 1024, 1024
      %65 = vsyncadd [#allocation8], %s64
      %s66 = sshll.u32 [#allocation7], 4
      %s67 = int_to_ptr.vmem [resolvable:$true] %s66
      %72 = dma.hbm_to_vmem [thread:$0]  %s7, 1024, %s67, [#allocation8], 64, 64, 4
    $region33: #{audio_module_forward.1} parent=1 // pred_fallthru
      _
    // Predicated region
    $region34: #{audio_module_forward.1} parent=1 // pred_check
      _
    $region35: #{audio_module_forward.1} parent=1 // pred_check_branch
      %74 = sbr.rel (0) target = $region37
    $region36: #{audio_module_forward.1} parent=1 // pred_region
      _
    $region37: #{audio_module_forward.1} parent=1 // pred_fallthru
      _
    // Predicated region
    $region38: #{audio_module_forward.1} parent=1 // pred_check
      _
    $region39: #{audio_module_forward.1} parent=1 // pred_check_branch
      %76 = sbr.rel (0) target = $region41
    $region40: #{audio_module_forward.1} parent=1 // pred_region
      %77 = dma.done [#allocation3], 8192
    $region41: #{audio_module_forward.1} parent=1 // pred_fallthru
      _
    // Predicated region
    $region42: #{audio_module_forward.1} parent=1 // pred_check
      _
    $region43: #{audio_module_forward.1} parent=1 // pred_check_branch
      %79 = sbr.rel (0) target = $region45
    $region44: #{audio_module_forward.1} parent=1 // pred_region
      %80 = dma.done [#allocation5], 32768
    $region45: #{audio_module_forward.1} parent=1 // pred_fallthru
      _
    // Predicated region
    $region46: #{audio_module_forward.1} parent=1 // pred_check
      _
    $region47: #{audio_module_forward.1} parent=1 // pred_check_branch
      %82 = sbr.rel (0) target = $region49
    $region48: #{audio_module_forward.1} parent=1 // pred_region
      %83 = dma.done [#allocation5], 8192
    $region49: #{audio_module_forward.1} parent=1 // pred_fallthru
      _
    // Predicated region
    $region50: #{audio_module_forward.1} parent=1 // pred_check
      _
    $region51: #{audio_module_forward.1} parent=1 // pred_check_branch
      %85 = sbr.rel (0) target = $region53
    $region52: #{audio_module_forward.1} parent=1 // pred_region
      %86 = dma.done [#allocation8], 1024
    $region53: #{audio_module_forward.1} parent=1 // pred_fallthru
      _
    %v88 = vld [vmem:[%s0] sm:$0xf]
    %v89 = vld [vmem:[#allocation2] sm:$0xff]
    %v90 = vld [vmem:[#allocation2 + $0x8] sm:$0xff]
    %v91 = vld [vmem:[#allocation2 + $0x10] sm:$0xff]
    %v92 = vld [vmem:[#allocation2 + $0x18] sm:$0xff]
    %v93 = vld [vmem:[#allocation2 + $0x20] sm:$0xff]
    %v94 = vld [vmem:[#allocation2 + $0x28] sm:$0xff]
    %v95 = vld [vmem:[#allocation2 + $0x30] sm:$0xff]
    %v96 = vld [vmem:[#allocation2 + $0x38] sm:$0xff]
    %v97 = vld [vmem:[#allocation2 + $0x40] sm:$0xff]
    %v98 = vld [vmem:[#allocation2 + $0x48] sm:$0xff]
    %v99 = vld [vmem:[#allocation2 + $0x50] sm:$0xff]
    %v100 = vld [vmem:[#allocation2 + $0x58] sm:$0xff]
    %v101 = vld [vmem:[#allocation2 + $0x60] sm:$0xff]
    %v102 = vld [vmem:[#allocation2 + $0x68] sm:$0xff]
    %v103 = vld [vmem:[#allocation2 + $0x70] sm:$0xff]
    %v104 = vld [vmem:[#allocation2 + $0x78] sm:$0xff]
    %v105 = vld [vmem:[#allocation2 + $0x80] sm:$0xff]
    %v106 = vld [vmem:[#allocation2 + $0x88] sm:$0xff]
    %v107 = vld [vmem:[#allocation2 + $0x90] sm:$0xff]
    %v108 = vld [vmem:[#allocation2 + $0x98] sm:$0xff]
    %v109 = vld [vmem:[#allocation2 + $0xa0] sm:$0xff]
    %v110 = vld [vmem:[#allocation2 + $0xa8] sm:$0xff]
    %v111 = vld [vmem:[#allocation2 + $0xb0] sm:$0xff]
    %v112 = vld [vmem:[#allocation2 + $0xb8] sm:$0xff]
    %v113 = vld [vmem:[#allocation2 + $0xc0] sm:$0xff]
    %v114 = vld [vmem:[#allocation2 + $0xc8] sm:$0xff]
    %v115 = vld [vmem:[#allocation2 + $0xd0] sm:$0xff]
    %v116 = vld [vmem:[#allocation2 + $0xd8] sm:$0xff]
    %v117 = vld [vmem:[#allocation2 + $0xe0] sm:$0xff]
    %v118 = vld [vmem:[#allocation2 + $0xe8] sm:$0xff]
    %v119 = vld [vmem:[#allocation2 + $0xf0] sm:$0xff]
    %v120 = vld [vmem:[#allocation2 + $0xf8] sm:$0xff]
    %v121 = vld [vmem:[#allocation2 + $0x100] sm:$0xff]
    %v122 = vld [vmem:[#allocation2 + $0x108] sm:$0xff]
    %v123 = vld [vmem:[#allocation2 + $0x110] sm:$0xff]
    %v124 = vld [vmem:[#allocation2 + $0x118] sm:$0xff]
    %v125 = vld [vmem:[#allocation2 + $0x120] sm:$0xff]
    %v126 = vld [vmem:[#allocation2 + $0x128] sm:$0xff]
    %v127 = vld [vmem:[#allocation2 + $0x130] sm:$0xff]
    %v128 = vld [vmem:[#allocation2 + $0x138] sm:$0xff]
    %v129 = vld [vmem:[#allocation2 + $0x140] sm:$0xff]
    %v130 = vld [vmem:[#allocation2 + $0x148] sm:$0xff]
    %v131 = vld [vmem:[#allocation2 + $0x150] sm:$0xff]
    %v132 = vld [vmem:[#allocation2 + $0x158] sm:$0xff]
    %v133 = vld [vmem:[#allocation2 + $0x160] sm:$0xff]
    %v134 = vld [vmem:[#allocation2 + $0x168] sm:$0xff]
    %v135 = vld [vmem:[#allocation2 + $0x170] sm:$0xff]
    %v136 = vld [vmem:[#allocation2 + $0x178] sm:$0xff]
    %v137 = vld [vmem:[#allocation2 + $0x180] sm:$0xff]
    %v138 = vld [vmem:[#allocation2 + $0x188] sm:$0xff]
    %v139 = vld [vmem:[#allocation2 + $0x190] sm:$0xff]
    %v140 = vld [vmem:[#allocation2 + $0x198] sm:$0xff]
    %v141 = vld [vmem:[#allocation2 + $0x1a0] sm:$0xff]
    %v142 = vld [vmem:[#allocation2 + $0x1a8] sm:$0xff]
    %v143 = vld [vmem:[#allocation2 + $0x1b0] sm:$0xff]
    %v144 = vld [vmem:[#allocation2 + $0x1b8] sm:$0xff]
    %v145 = vld [vmem:[#allocation2 + $0x1c0] sm:$0xff]
    %v146 = vld [vmem:[#allocation2 + $0x1c8] sm:$0xff]
    %v147 = vld [vmem:[#allocation2 + $0x1d0] sm:$0xff]
    %v148 = vld [vmem:[#allocation2 + $0x1d8] sm:$0xff]
    %v149 = vld [vmem:[#allocation2 + $0x1e0] sm:$0xff]
    %v150 = vld [vmem:[#allocation2 + $0x1e8] sm:$0xff]
    %v151 = vld [vmem:[#allocation2 + $0x1f0] sm:$0xff]
    %v152 = vld [vmem:[#allocation2 + $0x1f8] sm:$0xff]
    %v217 = vunpack.c.l.b16 %v89
    %v218 = vunpack.c.h.b16 %v89
    %v219 = vunpack.c.l.b16 %v90
    %v220 = vunpack.c.h.b16 %v90
    %v221 = vunpack.c.l.b16 %v91
    %v222 = vunpack.c.h.b16 %v91
    %v223 = vunpack.c.l.b16 %v92
    %v224 = vunpack.c.h.b16 %v92
    %v225 = vunpack.c.l.b16 %v93
    %v226 = vunpack.c.h.b16 %v93
    %v227 = vunpack.c.l.b16 %v94
    %v228 = vunpack.c.h.b16 %v94
    %v229 = vunpack.c.l.b16 %v95
    %v230 = vunpack.c.h.b16 %v95
    %v231 = vunpack.c.l.b16 %v96
    %v232 = vunpack.c.h.b16 %v96
    %v233 = vunpack.c.l.b16 %v97
    %v234 = vunpack.c.h.b16 %v97
    %v235 = vunpack.c.l.b16 %v98
    %v236 = vunpack.c.h.b16 %v98
    %v237 = vunpack.c.l.b16 %v99
    %v238 = vunpack.c.h.b16 %v99
    %v239 = vunpack.c.l.b16 %v100
    %v240 = vunpack.c.h.b16 %v100
    %v241 = vunpack.c.l.b16 %v101
    %v242 = vunpack.c.h.b16 %v101
    %v243 = vunpack.c.l.b16 %v102
    %v244 = vunpack.c.h.b16 %v102
    %v245 = vunpack.c.l.b16 %v103
    %v246 = vunpack.c.h.b16 %v103
    %v247 = vunpack.c.l.b16 %v104
    %v248 = vunpack.c.h.b16 %v104
    %v249 = vunpack.c.l.b16 %v105
    %v250 = vunpack.c.h.b16 %v105
    %v251 = vunpack.c.l.b16 %v106
    %v252 = vunpack.c.h.b16 %v106
    %v253 = vunpack.c.l.b16 %v107
    %v254 = vunpack.c.h.b16 %v107
    %v255 = vunpack.c.l.b16 %v108
    %v256 = vunpack.c.h.b16 %v108
    %v257 = vunpack.c.l.b16 %v109
    %v258 = vunpack.c.h.b16 %v109
    %v259 = vunpack.c.l.b16 %v110
    %v260 = vunpack.c.h.b16 %v110
    %v261 = vunpack.c.l.b16 %v111
    %v262 = vunpack.c.h.b16 %v111
    %v263 = vunpack.c.l.b16 %v112
    %v264 = vunpack.c.h.b16 %v112
    %v265 = vunpack.c.l.b16 %v113
    %v266 = vunpack.c.h.b16 %v113
    %v267 = vunpack.c.l.b16 %v114
    %v268 = vunpack.c.h.b16 %v114
    %v269 = vunpack.c.l.b16 %v115
    %v270 = vunpack.c.h.b16 %v115
    %v271 = vunpack.c.l.b16 %v116
    %v272 = vunpack.c.h.b16 %v116
    %v273 = vunpack.c.l.b16 %v117
    %v274 = vunpack.c.h.b16 %v117
    %v275 = vunpack.c.l.b16 %v118
    %v276 = vunpack.c.h.b16 %v118
    %v277 = vunpack.c.l.b16 %v119
    %v278 = vunpack.c.h.b16 %v119
    %v279 = vunpack.c.l.b16 %v120
    %v280 = vunpack.c.h.b16 %v120
    %v281 = vunpack.c.l.b16 %v121
    %v282 = vunpack.c.h.b16 %v121
    %v283 = vunpack.c.l.b16 %v122
    %v284 = vunpack.c.h.b16 %v122
    %v285 = vunpack.c.l.b16 %v123
    %v286 = vunpack.c.h.b16 %v123
    %v287 = vunpack.c.l.b16 %v124
    %v288 = vunpack.c.h.b16 %v124
    %v289 = vunpack.c.l.b16 %v125
    %v290 = vunpack.c.h.b16 %v125
    %v291 = vunpack.c.l.b16 %v126
    %v292 = vunpack.c.h.b16 %v126
    %v293 = vunpack.c.l.b16 %v127
    %v294 = vunpack.c.h.b16 %v127
    %v295 = vunpack.c.l.b16 %v128
    %v296 = vunpack.c.h.b16 %v128
    %v297 = vunpack.c.l.b16 %v129
    %v298 = vunpack.c.h.b16 %v129
    %v299 = vunpack.c.l.b16 %v130
    %v300 = vunpack.c.h.b16 %v130
    %v301 = vunpack.c.l.b16 %v131
    %v302 = vunpack.c.h.b16 %v131
    %v303 = vunpack.c.l.b16 %v132
    %v304 = vunpack.c.h.b16 %v132
    %v305 = vunpack.c.l.b16 %v133
    %v306 = vunpack.c.h.b16 %v133
    %v307 = vunpack.c.l.b16 %v134
    %v308 = vunpack.c.h.b16 %v134
    %v309 = vunpack.c.l.b16 %v135
    %v310 = vunpack.c.h.b16 %v135
    %v311 = vunpack.c.l.b16 %v136
    %v312 = vunpack.c.h.b16 %v136
    %v313 = vunpack.c.l.b16 %v137
    %v314 = vunpack.c.h.b16 %v137
    %v315 = vunpack.c.l.b16 %v138
    %v316 = vunpack.c.h.b16 %v138
    %v317 = vunpack.c.l.b16 %v139
    %v318 = vunpack.c.h.b16 %v139
    %v319 = vunpack.c.l.b16 %v140
    %v320 = vunpack.c.h.b16 %v140
    %v321 = vunpack.c.l.b16 %v141
    %v322 = vunpack.c.h.b16 %v141
    %v323 = vunpack.c.l.b16 %v142
    %v324 = vunpack.c.h.b16 %v142
    %v325 = vunpack.c.l.b16 %v143
    %v326 = vunpack.c.h.b16 %v143
    %v327 = vunpack.c.l.b16 %v144
    %v328 = vunpack.c.h.b16 %v144
    %v329 = vunpack.c.l.b16 %v145
    %v330 = vunpack.c.h.b16 %v145
    %v331 = vunpack.c.l.b16 %v146
    %v332 = vunpack.c.h.b16 %v146
    %v333 = vunpack.c.l.b16 %v147
    %v334 = vunpack.c.h.b16 %v147
    %v335 = vunpack.c.l.b16 %v148
    %v336 = vunpack.c.h.b16 %v148
    %v337 = vunpack.c.l.b16 %v149
    %v338 = vunpack.c.h.b16 %v149
    %v339 = vunpack.c.l.b16 %v150
    %v340 = vunpack.c.h.b16 %v150
    %v341 = vunpack.c.l.b16 %v151
    %v342 = vunpack.c.h.b16 %v151
    %v343 = vunpack.c.l.b16 %v152
    %v344 = vunpack.c.h.b16 %v152
    %v345 = vpack.c.b16 %v233, %v217
    %v346 = vpack.c.b16 %v234, %v218
    %v347 = vpack.c.b16 %v235, %v219
    %v348 = vpack.c.b16 %v236, %v220
    %v349 = vpack.c.b16 %v237, %v221
    %v350 = vpack.c.b16 %v238, %v222
    %v351 = vpack.c.b16 %v239, %v223
    %v352 = vpack.c.b16 %v240, %v224
    %v353 = vpack.c.b16 %v241, %v225
    %v354 = vpack.c.b16 %v242, %v226
    %v355 = vpack.c.b16 %v243, %v227
    %v356 = vpack.c.b16 %v244, %v228
    %v357 = vpack.c.b16 %v245, %v229
    %v358 = vpack.c.b16 %v246, %v230
    %v359 = vpack.c.b16 %v247, %v231
    %v360 = vpack.c.b16 %v248, %v232
    %v361 = vpack.c.b16 %v265, %v249
    %v362 = vpack.c.b16 %v266, %v250
    %v363 = vpack.c.b16 %v267, %v251
    %v364 = vpack.c.b16 %v268, %v252
    %v365 = vpack.c.b16 %v269, %v253
    %v366 = vpack.c.b16 %v270, %v254
    %v367 = vpack.c.b16 %v271, %v255
    %v368 = vpack.c.b16 %v272, %v256
    %v369 = vpack.c.b16 %v273, %v257
    %v370 = vpack.c.b16 %v274, %v258
    %v371 = vpack.c.b16 %v275, %v259
    %v372 = vpack.c.b16 %v276, %v260
    %v373 = vpack.c.b16 %v277, %v261
    %v374 = vpack.c.b16 %v278, %v262
    %v375 = vpack.c.b16 %v279, %v263
    %v376 = vpack.c.b16 %v280, %v264
    %v377 = vpack.c.b16 %v297, %v281
    %v378 = vpack.c.b16 %v298, %v282
    %v379 = vpack.c.b16 %v299, %v283
    %v380 = vpack.c.b16 %v300, %v284
    %v381 = vpack.c.b16 %v301, %v285
    %v382 = vpack.c.b16 %v302, %v286
    %v383 = vpack.c.b16 %v303, %v287
    %v384 = vpack.c.b16 %v304, %v288
    %v385 = vpack.c.b16 %v305, %v289
    %v386 = vpack.c.b16 %v306, %v290
    %v387 = vpack.c.b16 %v307, %v291
    %v388 = vpack.c.b16 %v308, %v292
    %v389 = vpack.c.b16 %v309, %v293
    %v390 = vpack.c.b16 %v310, %v294
    %v391 = vpack.c.b16 %v311, %v295
    %v392 = vpack.c.b16 %v312, %v296
    %v393 = vpack.c.b16 %v329, %v313
    %v394 = vpack.c.b16 %v330, %v314
    %v395 = vpack.c.b16 %v331, %v315
    %v396 = vpack.c.b16 %v332, %v316
    %v397 = vpack.c.b16 %v333, %v317
    %v398 = vpack.c.b16 %v334, %v318
    %v399 = vpack.c.b16 %v335, %v319
    %v400 = vpack.c.b16 %v336, %v320
    %v401 = vpack.c.b16 %v337, %v321
    %v402 = vpack.c.b16 %v338, %v322
    %v403 = vpack.c.b16 %v339, %v323
    %v404 = vpack.c.b16 %v340, %v324
    %v405 = vpack.c.b16 %v341, %v325
    %v406 = vpack.c.b16 %v342, %v326
    %v407 = vpack.c.b16 %v343, %v327
    %v408 = vpack.c.b16 %v344, %v328
    %vm473 = vcmask 523264
    %v475 = vsel %vm473, %v88, 0
    %477 = vmatprep.subr.bf16.mxu0 0
    %478 = vmatpush1.bf16.msra.mxu0 0
    %479 = vmatprep.subr.bf16.mxu0 0
    %480 = vmatpush1.bf16.msra.mxu0 0
    %481 = vmatprep.subr.bf16.mxu0 0
    %482 = vmatpush1.bf16.msra.mxu0 0
    %483 = vmatprep.subr.bf16.mxu0 0
    %484 = vmatpush1.bf16.msra.mxu0 0
    %485 = vmatprep.subr.bf16.mxu0 %v394
    %486 = vmatpush1.bf16.msra.mxu0 %v393
    %487 = vmatprep.subr.bf16.mxu0 %v378
    %488 = vmatpush1.bf16.msra.mxu0 %v377
    %489 = vmatprep.subr.bf16.mxu0 %v362
    %490 = vmatpush1.bf16.msra.mxu0 %v361
    %491 = vmatprep.subr.bf16.mxu0 %v346
    %492 = vmatpush1.bf16.msra.mxu0 %v345
    %493 = vmatprep.subr.bf16.mxu0 0
    %494 = vmatpush2.bf16.msra.mxu0 0
    %495 = vmatprep.subr.bf16.mxu0 0
    %496 = vmatpush2.bf16.msra.mxu0 0
    %497 = vmatprep.subr.bf16.mxu0 0
    %498 = vmatpush2.bf16.msra.mxu0 0
    %499 = vmatprep.subr.bf16.mxu0 0
    %500 = vmatpush2.bf16.msra.mxu0 0
    %501 = vmatprep.subr.bf16.mxu0 0
    %502 = vmatpush2.bf16.msra.mxu0 0
    %503 = vmatprep.subr.bf16.mxu0 0
    %504 = vmatpush2.bf16.msra.mxu0 0
    %505 = vmatprep.subr.bf16.mxu0 0
    %506 = vmatpush2.bf16.msra.mxu0 0
    %507 = vmatprep.subr.bf16.mxu0 0
    %508 = vmatpush2.bf16.msra.mxu0 0
    %509 = vmatprep.mubr.bf16.mxu0 0
    %510 = vmatmul.mubr.bf16.gmra.mxu0 %v475
    %v511 = vpop.f32.mrf.mxu0
    %v512 = vadd.f32 0.0, %v511
    %v513 = vpop.f32.mrf.mxu0
    %v514 = vadd.f32 0.0, %v513
    %v515 = vpop.f32.mrf.mxu0
    %v516 = vpop.f32.mrf.mxu0
    %517 = vdwg.mxu0
    %518 = vmatprep.subr.bf16.mxu0 0
    %519 = vmatpush1.bf16.msra.mxu0 0
    %520 = vmatprep.subr.bf16.mxu0 0
    %521 = vmatpush1.bf16.msra.mxu0 0
    %522 = vmatprep.subr.bf16.mxu0 0
    %523 = vmatpush1.bf16.msra.mxu0 0
    %524 = vmatprep.subr.bf16.mxu0 0
    %525 = vmatpush1.bf16.msra.mxu0 0
    %526 = vmatprep.subr.bf16.mxu0 %v396
    %527 = vmatpush1.bf16.msra.mxu0 %v395
    %528 = vmatprep.subr.bf16.mxu0 %v380
    %529 = vmatpush1.bf16.msra.mxu0 %v379
    %530 = vmatprep.subr.bf16.mxu0 %v364
    %531 = vmatpush1.bf16.msra.mxu0 %v363
    %532 = vmatprep.subr.bf16.mxu0 %v348
    %533 = vmatpush1.bf16.msra.mxu0 %v347
    %534 = vmatprep.subr.bf16.mxu0 0
    %535 = vmatpush2.bf16.msra.mxu0 0
    %536 = vmatprep.subr.bf16.mxu0 0
    %537 = vmatpush2.bf16.msra.mxu0 0
    %538 = vmatprep.subr.bf16.mxu0 0
    %539 = vmatpush2.bf16.msra.mxu0 0
    %540 = vmatprep.subr.bf16.mxu0 0
    %541 = vmatpush2.bf16.msra.mxu0 0
    %542 = vmatprep.subr.bf16.mxu0 0
    %543 = vmatpush2.bf16.msra.mxu0 0
    %544 = vmatprep.subr.bf16.mxu0 0
    %545 = vmatpush2.bf16.msra.mxu0 0
    %546 = vmatprep.subr.bf16.mxu0 0
    %547 = vmatpush2.bf16.msra.mxu0 0
    %548 = vmatprep.subr.bf16.mxu0 0
    %549 = vmatpush2.bf16.msra.mxu0 0
    %550 = vmatprep.mubr.bf16.mxu0 0
    %551 = vmatmul.mubr.bf16.gmra.mxu0 %v475
    %v552 = vpop.f32.mrf.mxu0
    %v553 = vadd.f32 0.0, %v552
    %v554 = vpop.f32.mrf.mxu0
    %v555 = vadd.f32 0.0, %v554
    %v556 = vpop.f32.mrf.mxu0
    %v557 = vpop.f32.mrf.mxu0
    %558 = vdwg.mxu0
    %559 = vmatprep.subr.bf16.mxu0 0
    %560 = vmatpush1.bf16.msra.mxu0 0
    %561 = vmatprep.subr.bf16.mxu0 0
    %562 = vmatpush1.bf16.msra.mxu0 0
    %563 = vmatprep.subr.bf16.mxu0 0
    %564 = vmatpush1.bf16.msra.mxu0 0
    %565 = vmatprep.subr.bf16.mxu0 0
    %566 = vmatpush1.bf16.msra.mxu0 0
    %567 = vmatprep.subr.bf16.mxu0 %v398
    %568 = vmatpush1.bf16.msra.mxu0 %v397
    %569 = vmatprep.subr.bf16.mxu0 %v382
    %570 = vmatpush1.bf16.msra.mxu0 %v381
    %571 = vmatprep.subr.bf16.mxu0 %v366
    %572 = vmatpush1.bf16.msra.mxu0 %v365
    %573 = vmatprep.subr.bf16.mxu0 %v350
    %574 = vmatpush1.bf16.msra.mxu0 %v349
    %575 = vmatprep.subr.bf16.mxu0 0
    %576 = vmatpush2.bf16.msra.mxu0 0
    %577 = vmatprep.subr.bf16.mxu0 0
    %578 = vmatpush2.bf16.msra.mxu0 0
    %579 = vmatprep.subr.bf16.mxu0 0
    %580 = vmatpush2.bf16.msra.mxu0 0
    %581 = vmatprep.subr.bf16.mxu0 0
    %582 = vmatpush2.bf16.msra.mxu0 0
    %583 = vmatprep.subr.bf16.mxu0 0
    %584 = vmatpush2.bf16.msra.mxu0 0
    %585 = vmatprep.subr.bf16.mxu0 0
    %586 = vmatpush2.bf16.msra.mxu0 0
    %587 = vmatprep.subr.bf16.mxu0 0
    %588 = vmatpush2.bf16.msra.mxu0 0
    %589 = vmatprep.subr.bf16.mxu0 0
    %590 = vmatpush2.bf16.msra.mxu0 0
    %591 = vmatprep.mubr.bf16.mxu0 0
    %592 = vmatmul.mubr.bf16.gmra.mxu0 %v475
    %v593 = vpop.f32.mrf.mxu0
    %v594 = vadd.f32 0.0, %v593
    %v595 = vpop.f32.mrf.mxu0
    %v596 = vadd.f32 0.0, %v595
    %v597 = vpop.f32.mrf.mxu0
    %v598 = vpop.f32.mrf.mxu0
    %599 = vdwg.mxu0
    %600 = vmatprep.subr.bf16.mxu0 0
    %601 = vmatpush1.bf16.msra.mxu0 0
    %602 = vmatprep.subr.bf16.mxu0 0
    %603 = vmatpush1.bf16.msra.mxu0 0
    %604 = vmatprep.subr.bf16.mxu0 0
    %605 = vmatpush1.bf16.msra.mxu0 0
    %606 = vmatprep.subr.bf16.mxu0 0
    %607 = vmatpush1.bf16.msra.mxu0 0
    %608 = vmatprep.subr.bf16.mxu0 %v400
    %609 = vmatpush1.bf16.msra.mxu0 %v399
    %610 = vmatprep.subr.bf16.mxu0 %v384
    %611 = vmatpush1.bf16.msra.mxu0 %v383
    %612 = vmatprep.subr.bf16.mxu0 %v368
    %613 = vmatpush1.bf16.msra.mxu0 %v367
    %614 = vmatprep.subr.bf16.mxu0 %v352
    %615 = vmatpush1.bf16.msra.mxu0 %v351
    %616 = vmatprep.subr.bf16.mxu0 0
    %617 = vmatpush2.bf16.msra.mxu0 0
    %618 = vmatprep.subr.bf16.mxu0 0
    %619 = vmatpush2.bf16.msra.mxu0 0
    %620 = vmatprep.subr.bf16.mxu0 0
    %621 = vmatpush2.bf16.msra.mxu0 0
    %622 = vmatprep.subr.bf16.mxu0 0
    %623 = vmatpush2.bf16.msra.mxu0 0
    %624 = vmatprep.subr.bf16.mxu0 0
    %625 = vmatpush2.bf16.msra.mxu0 0
    %626 = vmatprep.subr.bf16.mxu0 0
    %627 = vmatpush2.bf16.msra.mxu0 0
    %628 = vmatprep.subr.bf16.mxu0 0
    %629 = vmatpush2.bf16.msra.mxu0 0
    %630 = vmatprep.subr.bf16.mxu0 0
    %631 = vmatpush2.bf16.msra.mxu0 0
    %632 = vmatprep.mubr.bf16.mxu0 0
    %633 = vmatmul.mubr.bf16.gmra.mxu0 %v475
    %v634 = vpop.f32.mrf.mxu0
    %v635 = vadd.f32 0.0, %v634
    %v636 = vpop.f32.mrf.mxu0
    %v637 = vadd.f32 0.0, %v636
    %v638 = vpop.f32.mrf.mxu0
    %v639 = vpop.f32.mrf.mxu0
    %640 = vdwg.mxu0
    %641 = vmatprep.subr.bf16.mxu0 0
    %642 = vmatpush1.bf16.msra.mxu0 0
    %643 = vmatprep.subr.bf16.mxu0 0
    %644 = vmatpush1.bf16.msra.mxu0 0
    %645 = vmatprep.subr.bf16.mxu0 0
    %646 = vmatpush1.bf16.msra.mxu0 0
    %647 = vmatprep.subr.bf16.mxu0 0
    %648 = vmatpush1.bf16.msra.mxu0 0
    %649 = vmatprep.subr.bf16.mxu0 %v402
    %650 = vmatpush1.bf16.msra.mxu0 %v401
    %651 = vmatprep.subr.bf16.mxu0 %v386
    %652 = vmatpush1.bf16.msra.mxu0 %v385
    %653 = vmatprep.subr.bf16.mxu0 %v370
    %654 = vmatpush1.bf16.msra.mxu0 %v369
    %655 = vmatprep.subr.bf16.mxu0 %v354
    %656 = vmatpush1.bf16.msra.mxu0 %v353
    %657 = vmatprep.subr.bf16.mxu0 0
    %658 = vmatpush2.bf16.msra.mxu0 0
    %659 = vmatprep.subr.bf16.mxu0 0
    %660 = vmatpush2.bf16.msra.mxu0 0
    %661 = vmatprep.subr.bf16.mxu0 0
    %662 = vmatpush2.bf16.msra.mxu0 0
    %663 = vmatprep.subr.bf16.mxu0 0
    %664 = vmatpush2.bf16.msra.mxu0 0
    %665 = vmatprep.subr.bf16.mxu0 0
    %666 = vmatpush2.bf16.msra.mxu0 0
    %667 = vmatprep.subr.bf16.mxu0 0
    %668 = vmatpush2.bf16.msra.mxu0 0
    %669 = vmatprep.subr.bf16.mxu0 0
    %670 = vmatpush2.bf16.msra.mxu0 0
    %671 = vmatprep.subr.bf16.mxu0 0
    %672 = vmatpush2.bf16.msra.mxu0 0
    %673 = vmatprep.mubr.bf16.mxu0 0
    %674 = vmatmul.mubr.bf16.gmra.mxu0 %v475
    %v675 = vpop.f32.mrf.mxu0
    %v676 = vadd.f32 0.0, %v675
    %v677 = vpop.f32.mrf.mxu0
    %v678 = vadd.f32 0.0, %v677
    %v679 = vpop.f32.mrf.mxu0
    %v680 = vpop.f32.mrf.mxu0
    %681 = vdwg.mxu0
    %682 = vmatprep.subr.bf16.mxu0 0
    %683 = vmatpush1.bf16.msra.mxu0 0
    %684 = vmatprep.subr.bf16.mxu0 0
    %685 = vmatpush1.bf16.msra.mxu0 0
    %686 = vmatprep.subr.bf16.mxu0 0
    %687 = vmatpush1.bf16.msra.mxu0 0
    %688 = vmatprep.subr.bf16.mxu0 0
    %689 = vmatpush1.bf16.msra.mxu0 0
    %690 = vmatprep.subr.bf16.mxu0 %v404
    %691 = vmatpush1.bf16.msra.mxu0 %v403
    %692 = vmatprep.subr.bf16.mxu0 %v388
    %693 = vmatpush1.bf16.msra.mxu0 %v387
    %694 = vmatprep.subr.bf16.mxu0 %v372
    %695 = vmatpush1.bf16.msra.mxu0 %v371
    %696 = vmatprep.subr.bf16.mxu0 %v356
    %697 = vmatpush1.bf16.msra.mxu0 %v355
    %698 = vmatprep.subr.bf16.mxu0 0
    %699 = vmatpush2.bf16.msra.mxu0 0
    %700 = vmatprep.subr.bf16.mxu0 0
    %701 = vmatpush2.bf16.msra.mxu0 0
    %702 = vmatprep.subr.bf16.mxu0 0
    %703 = vmatpush2.bf16.msra.mxu0 0
    %704 = vmatprep.subr.bf16.mxu0 0
    %705 = vmatpush2.bf16.msra.mxu0 0
    %706 = vmatprep.subr.bf16.mxu0 0
    %707 = vmatpush2.bf16.msra.mxu0 0
    %708 = vmatprep.subr.bf16.mxu0 0
    %709 = vmatpush2.bf16.msra.mxu0 0
    %710 = vmatprep.subr.bf16.mxu0 0
    %711 = vmatpush2.bf16.msra.mxu0 0
    %712 = vmatprep.subr.bf16.mxu0 0
    %713 = vmatpush2.bf16.msra.mxu0 0
    %714 = vmatprep.mubr.bf16.mxu0 0
    %715 = vmatmul.mubr.bf16.gmra.mxu0 %v475
    %v716 = vpop.f32.mrf.mxu0
    %v717 = vadd.f32 0.0, %v716
    %v718 = vpop.f32.mrf.mxu0
    %v719 = vadd.f32 0.0, %v718
    %v720 = vpop.f32.mrf.mxu0
    %v721 = vpop.f32.mrf.mxu0
    %722 = vdwg.mxu0
    %723 = vmatprep.subr.bf16.mxu0 0
    %724 = vmatpush1.bf16.msra.mxu0 0
    %725 = vmatprep.subr.bf16.mxu0 0
    %726 = vmatpush1.bf16.msra.mxu0 0
    %727 = vmatprep.subr.bf16.mxu0 0
    %728 = vmatpush1.bf16.msra.mxu0 0
    %729 = vmatprep.subr.bf16.mxu0 0
    %730 = vmatpush1.bf16.msra.mxu0 0
    %731 = vmatprep.subr.bf16.mxu0 %v406
    %732 = vmatpush1.bf16.msra.mxu0 %v405
    %733 = vmatprep.subr.bf16.mxu0 %v390
    %734 = vmatpush1.bf16.msra.mxu0 %v389
    %735 = vmatprep.subr.bf16.mxu0 %v374
    %736 = vmatpush1.bf16.msra.mxu0 %v373
    %737 = vmatprep.subr.bf16.mxu0 %v358
    %738 = vmatpush1.bf16.msra.mxu0 %v357
    %739 = vmatprep.subr.bf16.mxu0 0
    %740 = vmatpush2.bf16.msra.mxu0 0
    %741 = vmatprep.subr.bf16.mxu0 0
    %742 = vmatpush2.bf16.msra.mxu0 0
    %743 = vmatprep.subr.bf16.mxu0 0
    %744 = vmatpush2.bf16.msra.mxu0 0
    %745 = vmatprep.subr.bf16.mxu0 0
    %746 = vmatpush2.bf16.msra.mxu0 0
    %747 = vmatprep.subr.bf16.mxu0 0
    %748 = vmatpush2.bf16.msra.mxu0 0
    %749 = vmatprep.subr.bf16.mxu0 0
    %750 = vmatpush2.bf16.msra.mxu0 0
    %751 = vmatprep.subr.bf16.mxu0 0
    %752 = vmatpush2.bf16.msra.mxu0 0
    %753 = vmatprep.subr.bf16.mxu0 0
    %754 = vmatpush2.bf16.msra.mxu0 0
    %755 = vmatprep.mubr.bf16.mxu0 0
    %756 = vmatmul.mubr.bf16.gmra.mxu0 %v475
    %v757 = vpop.f32.mrf.mxu0
    %v758 = vadd.f32 0.0, %v757
    %v759 = vpop.f32.mrf.mxu0
    %v760 = vadd.f32 0.0, %v759
    %v761 = vpop.f32.mrf.mxu0
    %v762 = vpop.f32.mrf.mxu0
    %763 = vdwg.mxu0
    %764 = vmatprep.subr.bf16.mxu0 0
    %765 = vmatpush1.bf16.msra.mxu0 0
    %766 = vmatprep.subr.bf16.mxu0 0
    %767 = vmatpush1.bf16.msra.mxu0 0
    %768 = vmatprep.subr.bf16.mxu0 0
    %769 = vmatpush1.bf16.msra.mxu0 0
    %770 = vmatprep.subr.bf16.mxu0 0
    %771 = vmatpush1.bf16.msra.mxu0 0
    %772 = vmatprep.subr.bf16.mxu0 %v408
    %773 = vmatpush1.bf16.msra.mxu0 %v407
    %774 = vmatprep.subr.bf16.mxu0 %v392
    %775 = vmatpush1.bf16.msra.mxu0 %v391
    %776 = vmatprep.subr.bf16.mxu0 %v376
    %777 = vmatpush1.bf16.msra.mxu0 %v375
    %778 = vmatprep.subr.bf16.mxu0 %v360
    %779 = vmatpush1.bf16.msra.mxu0 %v359
    %780 = vmatprep.subr.bf16.mxu0 0
    %781 = vmatpush2.bf16.msra.mxu0 0
    %782 = vmatprep.subr.bf16.mxu0 0
    %783 = vmatpush2.bf16.msra.mxu0 0
    %784 = vmatprep.subr.bf16.mxu0 0
    %785 = vmatpush2.bf16.msra.mxu0 0
    %786 = vmatprep.subr.bf16.mxu0 0
    %787 = vmatpush2.bf16.msra.mxu0 0
    %788 = vmatprep.subr.bf16.mxu0 0
    %789 = vmatpush2.bf16.msra.mxu0 0
    %790 = vmatprep.subr.bf16.mxu0 0
    %791 = vmatpush2.bf16.msra.mxu0 0
    %792 = vmatprep.subr.bf16.mxu0 0
    %793 = vmatpush2.bf16.msra.mxu0 0
    %794 = vmatprep.subr.bf16.mxu0 0
    %795 = vmatpush2.bf16.msra.mxu0 0
    %796 = vmatprep.mubr.bf16.mxu0 0
    %797 = vmatmul.mubr.bf16.gmra.mxu0 %v475
    %v798 = vpop.f32.mrf.mxu0
    %v799 = vadd.f32 0.0, %v798
    %v800 = vpop.f32.mrf.mxu0
    %v801 = vadd.f32 0.0, %v800
    %v802 = vpop.f32.mrf.mxu0
    %v803 = vpop.f32.mrf.mxu0
    %804 = vdwg.mxu0
    %v805 = vmax.f32 %v512, %v594
    %v806 = vmax.f32 %v514, %v596
    %v807 = vmax.f32 %v553, %v635
    %v808 = vmax.f32 %v555, %v637
    %v809 = vmax.f32 %v676, %v758
    %v810 = vmax.f32 %v678, %v760
    %v811 = vmax.f32 %v717, %v799
    %v812 = vmax.f32 %v719, %v801
    %v813 = vmax.f32 %v805, %v809
    %v814 = vmax.f32 %v806, %v810
    %v815 = vmax.f32 %v807, %v811
    %v816 = vmax.f32 %v808, %v812
    %v817 = vld [vmem:[%s2] sm:$0xf]
    %v819 = vlaneseq
    %v820 = vshrl.u32 %v819, 7
    %v821 = vsub.s32 0, %v820
    %v822 = vrot.slane %v817, %v821
    %v823 = vlaneseq
    %v824 = vshrl.u32 %v823, 7
    %v825 = vsub.s32 1, %v824
    %v826 = vrot.slane %v817, %v825
    %v827 = vlaneseq
    %v828 = vshrl.u32 %v827, 7
    %v829 = vsub.s32 2, %v828
    %v830 = vrot.slane %v817, %v829
    %v831 = vlaneseq
    %v832 = vshrl.u32 %v831, 7
    %v833 = vsub.s32 3, %v832
    %v834 = vrot.slane %v817, %v833
    %v839 = vadd.f32 %v813, %v822
    %v840 = vadd.f32 %v814, %v826
    %v841 = vadd.f32 %v815, %v830
    %v842 = vadd.f32 %v816, %v834
    %v843 = vmax.f32 %v839, 0.0
    %v844 = vmax.f32 %v840, 0.0
    %v845 = vmax.f32 %v841, 0.0
    %v846 = vmax.f32 %v842, 0.0
    %v847 = vpack.c.bf16 %v843, %v843
    %v848 = vpack.c.bf16 %v844, %v844
    %v849 = vpack.c.bf16 %v845, %v845
    %v850 = vpack.c.bf16 %v846, %v846
    %v851 = vld [vmem:[#allocation4] sm:$0xff]
    %v852 = vld [vmem:[#allocation4 + $0x8] sm:$0xff]
    %v853 = vld [vmem:[#allocation4 + $0x10] sm:$0xff]
    %v854 = vld [vmem:[#allocation4 + $0x18] sm:$0xff]
    %v855 = vld [vmem:[#allocation4 + $0x20] sm:$0xff]
    %v856 = vld [vmem:[#allocation4 + $0x28] sm:$0xff]
    %v857 = vld [vmem:[#allocation4 + $0x30] sm:$0xff]
    %v858 = vld [vmem:[#allocation4 + $0x38] sm:$0xff]
    %v859 = vld [vmem:[#allocation4 + $0x40] sm:$0xff]
    %v860 = vld [vmem:[#allocation4 + $0x48] sm:$0xff]
    %v861 = vld [vmem:[#allocation4 + $0x50] sm:$0xff]
    %v862 = vld [vmem:[#allocation4 + $0x58] sm:$0xff]
    %v863 = vld [vmem:[#allocation4 + $0x60] sm:$0xff]
    %v864 = vld [vmem:[#allocation4 + $0x68] sm:$0xff]
    %v865 = vld [vmem:[#allocation4 + $0x70] sm:$0xff]
    %v866 = vld [vmem:[#allocation4 + $0x78] sm:$0xff]
    %v867 = vld [vmem:[#allocation4 + $0x80] sm:$0xff]
    %v868 = vld [vmem:[#allocation4 + $0x88] sm:$0xff]
    %v869 = vld [vmem:[#allocation4 + $0x90] sm:$0xff]
    %v870 = vld [vmem:[#allocation4 + $0x98] sm:$0xff]
    %v871 = vld [vmem:[#allocation4 + $0xa0] sm:$0xff]
    %v872 = vld [vmem:[#allocation4 + $0xa8] sm:$0xff]
    %v873 = vld [vmem:[#allocation4 + $0xb0] sm:$0xff]
    %v874 = vld [vmem:[#allocation4 + $0xb8] sm:$0xff]
    %v875 = vld [vmem:[#allocation4 + $0xc0] sm:$0xff]
    %v876 = vld [vmem:[#allocation4 + $0xc8] sm:$0xff]
    %v877 = vld [vmem:[#allocation4 + $0xd0] sm:$0xff]
    %v878 = vld [vmem:[#allocation4 + $0xd8] sm:$0xff]
    %v879 = vld [vmem:[#allocation4 + $0xe0] sm:$0xff]
    %v880 = vld [vmem:[#allocation4 + $0xe8] sm:$0xff]
    %v881 = vld [vmem:[#allocation4 + $0xf0] sm:$0xff]
    %v882 = vld [vmem:[#allocation4 + $0xf8] sm:$0xff]
    %v883 = vld [vmem:[#allocation4 + $0x100] sm:$0xff]
    %v884 = vld [vmem:[#allocation4 + $0x108] sm:$0xff]
    %v885 = vld [vmem:[#allocation4 + $0x110] sm:$0xff]
    %v886 = vld [vmem:[#allocation4 + $0x118] sm:$0xff]
    %v887 = vld [vmem:[#allocation4 + $0x120] sm:$0xff]
    %v888 = vld [vmem:[#allocation4 + $0x128] sm:$0xff]
    %v889 = vld [vmem:[#allocation4 + $0x130] sm:$0xff]
    %v890 = vld [vmem:[#allocation4 + $0x138] sm:$0xff]
    %v891 = vld [vmem:[#allocation4 + $0x140] sm:$0xff]
    %v892 = vld [vmem:[#allocation4 + $0x148] sm:$0xff]
    %v893 = vld [vmem:[#allocation4 + $0x150] sm:$0xff]
    %v894 = vld [vmem:[#allocation4 + $0x158] sm:$0xff]
    %v895 = vld [vmem:[#allocation4 + $0x160] sm:$0xff]
    %v896 = vld [vmem:[#allocation4 + $0x168] sm:$0xff]
    %v897 = vld [vmem:[#allocation4 + $0x170] sm:$0xff]
    %v898 = vld [vmem:[#allocation4 + $0x178] sm:$0xff]
    %v899 = vld [vmem:[#allocation4 + $0x180] sm:$0xff]
    %v900 = vld [vmem:[#allocation4 + $0x188] sm:$0xff]
    %v901 = vld [vmem:[#allocation4 + $0x190] sm:$0xff]
    %v902 = vld [vmem:[#allocation4 + $0x198] sm:$0xff]
    %v903 = vld [vmem:[#allocation4 + $0x1a0] sm:$0xff]
    %v904 = vld [vmem:[#allocation4 + $0x1a8] sm:$0xff]
    %v905 = vld [vmem:[#allocation4 + $0x1b0] sm:$0xff]
    %v906 = vld [vmem:[#allocation4 + $0x1b8] sm:$0xff]
    %v907 = vld [vmem:[#allocation4 + $0x1c0] sm:$0xff]
    %v908 = vld [vmem:[#allocation4 + $0x1c8] sm:$0xff]
    %v909 = vld [vmem:[#allocation4 + $0x1d0] sm:$0xff]
    %v910 = vld [vmem:[#allocation4 + $0x1d8] sm:$0xff]
    %v911 = vld [vmem:[#allocation4 + $0x1e0] sm:$0xff]
    %v912 = vld [vmem:[#allocation4 + $0x1e8] sm:$0xff]
    %v913 = vld [vmem:[#allocation4 + $0x1f0] sm:$0xff]
    %v914 = vld [vmem:[#allocation4 + $0x1f8] sm:$0xff]
    %v915 = vld [vmem:[#allocation4 + $0x200] sm:$0xff]
    %v916 = vld [vmem:[#allocation4 + $0x208] sm:$0xff]
    %v917 = vld [vmem:[#allocation4 + $0x210] sm:$0xff]
    %v918 = vld [vmem:[#allocation4 + $0x218] sm:$0xff]
    %v919 = vld [vmem:[#allocation4 + $0x220] sm:$0xff]
    %v920 = vld [vmem:[#allocation4 + $0x228] sm:$0xff]
    %v921 = vld [vmem:[#allocation4 + $0x230] sm:$0xff]
    %v922 = vld [vmem:[#allocation4 + $0x238] sm:$0xff]
    %v923 = vld [vmem:[#allocation4 + $0x240] sm:$0xff]
    %v924 = vld [vmem:[#allocation4 + $0x248] sm:$0xff]
    %v925 = vld [vmem:[#allocation4 + $0x250] sm:$0xff]
    %v926 = vld [vmem:[#allocation4 + $0x258] sm:$0xff]
    %v927 = vld [vmem:[#allocation4 + $0x260] sm:$0xff]
    %v928 = vld [vmem:[#allocation4 + $0x268] sm:$0xff]
    %v929 = vld [vmem:[#allocation4 + $0x270] sm:$0xff]
    %v930 = vld [vmem:[#allocation4 + $0x278] sm:$0xff]
    %v931 = vld [vmem:[#allocation4 + $0x280] sm:$0xff]
    %v932 = vld [vmem:[#allocation4 + $0x288] sm:$0xff]
    %v933 = vld [vmem:[#allocation4 + $0x290] sm:$0xff]
    %v934 = vld [vmem:[#allocation4 + $0x298] sm:$0xff]
    %v935 = vld [vmem:[#allocation4 + $0x2a0] sm:$0xff]
    %v936 = vld [vmem:[#allocation4 + $0x2a8] sm:$0xff]
    %v937 = vld [vmem:[#allocation4 + $0x2b0] sm:$0xff]
    %v938 = vld [vmem:[#allocation4 + $0x2b8] sm:$0xff]
    %v939 = vld [vmem:[#allocation4 + $0x2c0] sm:$0xff]
    %v940 = vld [vmem:[#allocation4 + $0x2c8] sm:$0xff]
    %v941 = vld [vmem:[#allocation4 + $0x2d0] sm:$0xff]
    %v942 = vld [vmem:[#allocation4 + $0x2d8] sm:$0xff]
    %v943 = vld [vmem:[#allocation4 + $0x2e0] sm:$0xff]
    %v944 = vld [vmem:[#allocation4 + $0x2e8] sm:$0xff]
    %v945 = vld [vmem:[#allocation4 + $0x2f0] sm:$0xff]
    %v946 = vld [vmem:[#allocation4 + $0x2f8] sm:$0xff]
    %v947 = vld [vmem:[#allocation4 + $0x300] sm:$0xff]
    %v948 = vld [vmem:[#allocation4 + $0x308] sm:$0xff]
    %v949 = vld [vmem:[#allocation4 + $0x310] sm:$0xff]
    %v950 = vld [vmem:[#allocation4 + $0x318] sm:$0xff]
    %v951 = vld [vmem:[#allocation4 + $0x320] sm:$0xff]
    %v952 = vld [vmem:[#allocation4 + $0x328] sm:$0xff]
    %v953 = vld [vmem:[#allocation4 + $0x330] sm:$0xff]
    %v954 = vld [vmem:[#allocation4 + $0x338] sm:$0xff]
    %v955 = vld [vmem:[#allocation4 + $0x340] sm:$0xff]
    %v956 = vld [vmem:[#allocation4 + $0x348] sm:$0xff]
    %v957 = vld [vmem:[#allocation4 + $0x350] sm:$0xff]
    %v958 = vld [vmem:[#allocation4 + $0x358] sm:$0xff]
    %v959 = vld [vmem:[#allocation4 + $0x360] sm:$0xff]
    %v960 = vld [vmem:[#allocation4 + $0x368] sm:$0xff]
    %v961 = vld [vmem:[#allocation4 + $0x370] sm:$0xff]
    %v962 = vld [vmem:[#allocation4 + $0x378] sm:$0xff]
    %v963 = vld [vmem:[#allocation4 + $0x380] sm:$0xff]
    %v964 = vld [vmem:[#allocation4 + $0x388] sm:$0xff]
    %v965 = vld [vmem:[#allocation4 + $0x390] sm:$0xff]
    %v966 = vld [vmem:[#allocation4 + $0x398] sm:$0xff]
    %v967 = vld [vmem:[#allocation4 + $0x3a0] sm:$0xff]
    %v968 = vld [vmem:[#allocation4 + $0x3a8] sm:$0xff]
    %v969 = vld [vmem:[#allocation4 + $0x3b0] sm:$0xff]
    %v970 = vld [vmem:[#allocation4 + $0x3b8] sm:$0xff]
    %v971 = vld [vmem:[#allocation4 + $0x3c0] sm:$0xff]
    %v972 = vld [vmem:[#allocation4 + $0x3c8] sm:$0xff]
    %v973 = vld [vmem:[#allocation4 + $0x3d0] sm:$0xff]
    %v974 = vld [vmem:[#allocation4 + $0x3d8] sm:$0xff]
    %v975 = vld [vmem:[#allocation4 + $0x3e0] sm:$0xff]
    %v976 = vld [vmem:[#allocation4 + $0x3e8] sm:$0xff]
    %v977 = vld [vmem:[#allocation4 + $0x3f0] sm:$0xff]
    %v978 = vld [vmem:[#allocation4 + $0x3f8] sm:$0xff]
    %v979 = vld [vmem:[#allocation4 + $0x400] sm:$0xff]
    %v980 = vld [vmem:[#allocation4 + $0x408] sm:$0xff]
    %v981 = vld [vmem:[#allocation4 + $0x410] sm:$0xff]
    %v982 = vld [vmem:[#allocation4 + $0x418] sm:$0xff]
    %v983 = vld [vmem:[#allocation4 + $0x420] sm:$0xff]
    %v984 = vld [vmem:[#allocation4 + $0x428] sm:$0xff]
    %v985 = vld [vmem:[#allocation4 + $0x430] sm:$0xff]
    %v986 = vld [vmem:[#allocation4 + $0x438] sm:$0xff]
    %v987 = vld [vmem:[#allocation4 + $0x440] sm:$0xff]
    %v988 = vld [vmem:[#allocation4 + $0x448] sm:$0xff]
    %v989 = vld [vmem:[#allocation4 + $0x450] sm:$0xff]
    %v990 = vld [vmem:[#allocation4 + $0x458] sm:$0xff]
    %v991 = vld [vmem:[#allocation4 + $0x460] sm:$0xff]
    %v992 = vld [vmem:[#allocation4 + $0x468] sm:$0xff]
    %v993 = vld [vmem:[#allocation4 + $0x470] sm:$0xff]
    %v994 = vld [vmem:[#allocation4 + $0x478] sm:$0xff]
    %v995 = vld [vmem:[#allocation4 + $0x480] sm:$0xff]
    %v996 = vld [vmem:[#allocation4 + $0x488] sm:$0xff]
    %v997 = vld [vmem:[#allocation4 + $0x490] sm:$0xff]
    %v998 = vld [vmem:[#allocation4 + $0x498] sm:$0xff]
    %v999 = vld [vmem:[#allocation4 + $0x4a0] sm:$0xff]
    %v1000 = vld [vmem:[#allocation4 + $0x4a8] sm:$0xff]
    %v1001 = vld [vmem:[#allocation4 + $0x4b0] sm:$0xff]
    %v1002 = vld [vmem:[#allocation4 + $0x4b8] sm:$0xff]
    %v1003 = vld [vmem:[#allocation4 + $0x4c0] sm:$0xff]
    %v1004 = vld [vmem:[#allocation4 + $0x4c8] sm:$0xff]
    %v1005 = vld [vmem:[#allocation4 + $0x4d0] sm:$0xff]
    %v1006 = vld [vmem:[#allocation4 + $0x4d8] sm:$0xff]
    %v1007 = vld [vmem:[#allocation4 + $0x4e0] sm:$0xff]
    %v1008 = vld [vmem:[#allocation4 + $0x4e8] sm:$0xff]
    %v1009 = vld [vmem:[#allocation4 + $0x4f0] sm:$0xff]
    %v1010 = vld [vmem:[#allocation4 + $0x4f8] sm:$0xff]
    %v1011 = vld [vmem:[#allocation4 + $0x500] sm:$0xff]
    %v1012 = vld [vmem:[#allocation4 + $0x508] sm:$0xff]
    %v1013 = vld [vmem:[#allocation4 + $0x510] sm:$0xff]
    %v1014 = vld [vmem:[#allocation4 + $0x518] sm:$0xff]
    %v1015 = vld [vmem:[#allocation4 + $0x520] sm:$0xff]
    %v1016 = vld [vmem:[#allocation4 + $0x528] sm:$0xff]
    %v1017 = vld [vmem:[#allocation4 + $0x530] sm:$0xff]
    %v1018 = vld [vmem:[#allocation4 + $0x538] sm:$0xff]
    %v1019 = vld [vmem:[#allocation4 + $0x540] sm:$0xff]
    %v1020 = vld [vmem:[#allocation4 + $0x548] sm:$0xff]
    %v1021 = vld [vmem:[#allocation4 + $0x550] sm:$0xff]
    %v1022 = vld [vmem:[#allocation4 + $0x558] sm:$0xff]
    %v1023 = vld [vmem:[#allocation4 + $0x560] sm:$0xff]
    %v1024 = vld [vmem:[#allocation4 + $0x568] sm:$0xff]
    %v1025 = vld [vmem:[#allocation4 + $0x570] sm:$0xff]
    %v1026 = vld [vmem:[#allocation4 + $0x578] sm:$0xff]
    %v1027 = vld [vmem:[#allocation4 + $0x580] sm:$0xff]
    %v1028 = vld [vmem:[#allocation4 + $0x588] sm:$0xff]
    %v1029 = vld [vmem:[#allocation4 + $0x590] sm:$0xff]
    %v1030 = vld [vmem:[#allocation4 + $0x598] sm:$0xff]
    %v1031 = vld [vmem:[#allocation4 + $0x5a0] sm:$0xff]
    %v1032 = vld [vmem:[#allocation4 + $0x5a8] sm:$0xff]
    %v1033 = vld [vmem:[#allocation4 + $0x5b0] sm:$0xff]
    %v1034 = vld [vmem:[#allocation4 + $0x5b8] sm:$0xff]
    %v1035 = vld [vmem:[#allocation4 + $0x5c0] sm:$0xff]
    %v1036 = vld [vmem:[#allocation4 + $0x5c8] sm:$0xff]
    %v1037 = vld [vmem:[#allocation4 + $0x5d0] sm:$0xff]
    %v1038 = vld [vmem:[#allocation4 + $0x5d8] sm:$0xff]
    %v1039 = vld [vmem:[#allocation4 + $0x5e0] sm:$0xff]
    %v1040 = vld [vmem:[#allocation4 + $0x5e8] sm:$0xff]
    %v1041 = vld [vmem:[#allocation4 + $0x5f0] sm:$0xff]
    %v1042 = vld [vmem:[#allocation4 + $0x5f8] sm:$0xff]
    %v1043 = vld [vmem:[#allocation4 + $0x600] sm:$0xff]
    %v1044 = vld [vmem:[#allocation4 + $0x608] sm:$0xff]
    %v1045 = vld [vmem:[#allocation4 + $0x610] sm:$0xff]
    %v1046 = vld [vmem:[#allocation4 + $0x618] sm:$0xff]
    %v1047 = vld [vmem:[#allocation4 + $0x620] sm:$0xff]
    %v1048 = vld [vmem:[#allocation4 + $0x628] sm:$0xff]
    %v1049 = vld [vmem:[#allocation4 + $0x630] sm:$0xff]
    %v1050 = vld [vmem:[#allocation4 + $0x638] sm:$0xff]
    %v1051 = vld [vmem:[#allocation4 + $0x640] sm:$0xff]
    %v1052 = vld [vmem:[#allocation4 + $0x648] sm:$0xff]
    %v1053 = vld [vmem:[#allocation4 + $0x650] sm:$0xff]
    %v1054 = vld [vmem:[#allocation4 + $0x658] sm:$0xff]
    %v1055 = vld [vmem:[#allocation4 + $0x660] sm:$0xff]
    %v1056 = vld [vmem:[#allocation4 + $0x668] sm:$0xff]
    %v1057 = vld [vmem:[#allocation4 + $0x670] sm:$0xff]
    %v1058 = vld [vmem:[#allocation4 + $0x678] sm:$0xff]
    %v1059 = vld [vmem:[#allocation4 + $0x680] sm:$0xff]
    %v1060 = vld [vmem:[#allocation4 + $0x688] sm:$0xff]
    %v1061 = vld [vmem:[#allocation4 + $0x690] sm:$0xff]
    %v1062 = vld [vmem:[#allocation4 + $0x698] sm:$0xff]
    %v1063 = vld [vmem:[#allocation4 + $0x6a0] sm:$0xff]
    %v1064 = vld [vmem:[#allocation4 + $0x6a8] sm:$0xff]
    %v1065 = vld [vmem:[#allocation4 + $0x6b0] sm:$0xff]
    %v1066 = vld [vmem:[#allocation4 + $0x6b8] sm:$0xff]
    %v1067 = vld [vmem:[#allocation4 + $0x6c0] sm:$0xff]
    %v1068 = vld [vmem:[#allocation4 + $0x6c8] sm:$0xff]
    %v1069 = vld [vmem:[#allocation4 + $0x6d0] sm:$0xff]
    %v1070 = vld [vmem:[#allocation4 + $0x6d8] sm:$0xff]
    %v1071 = vld [vmem:[#allocation4 + $0x6e0] sm:$0xff]
    %v1072 = vld [vmem:[#allocation4 + $0x6e8] sm:$0xff]
    %v1073 = vld [vmem:[#allocation4 + $0x6f0] sm:$0xff]
    %v1074 = vld [vmem:[#allocation4 + $0x6f8] sm:$0xff]
    %v1075 = vld [vmem:[#allocation4 + $0x700] sm:$0xff]
    %v1076 = vld [vmem:[#allocation4 + $0x708] sm:$0xff]
    %v1077 = vld [vmem:[#allocation4 + $0x710] sm:$0xff]
    %v1078 = vld [vmem:[#allocation4 + $0x718] sm:$0xff]
    %v1079 = vld [vmem:[#allocation4 + $0x720] sm:$0xff]
    %v1080 = vld [vmem:[#allocation4 + $0x728] sm:$0xff]
    %v1081 = vld [vmem:[#allocation4 + $0x730] sm:$0xff]
    %v1082 = vld [vmem:[#allocation4 + $0x738] sm:$0xff]
    %v1083 = vld [vmem:[#allocation4 + $0x740] sm:$0xff]
    %v1084 = vld [vmem:[#allocation4 + $0x748] sm:$0xff]
    %v1085 = vld [vmem:[#allocation4 + $0x750] sm:$0xff]
    %v1086 = vld [vmem:[#allocation4 + $0x758] sm:$0xff]
    %v1087 = vld [vmem:[#allocation4 + $0x760] sm:$0xff]
    %v1088 = vld [vmem:[#allocation4 + $0x768] sm:$0xff]
    %v1089 = vld [vmem:[#allocation4 + $0x770] sm:$0xff]
    %v1090 = vld [vmem:[#allocation4 + $0x778] sm:$0xff]
    %v1091 = vld [vmem:[#allocation4 + $0x780] sm:$0xff]
    %v1092 = vld [vmem:[#allocation4 + $0x788] sm:$0xff]
    %v1093 = vld [vmem:[#allocation4 + $0x790] sm:$0xff]
    %v1094 = vld [vmem:[#allocation4 + $0x798] sm:$0xff]
    %v1095 = vld [vmem:[#allocation4 + $0x7a0] sm:$0xff]
    %v1096 = vld [vmem:[#allocation4 + $0x7a8] sm:$0xff]
    %v1097 = vld [vmem:[#allocation4 + $0x7b0] sm:$0xff]
    %v1098 = vld [vmem:[#allocation4 + $0x7b8] sm:$0xff]
    %v1099 = vld [vmem:[#allocation4 + $0x7c0] sm:$0xff]
    %v1100 = vld [vmem:[#allocation4 + $0x7c8] sm:$0xff]
    %v1101 = vld [vmem:[#allocation4 + $0x7d0] sm:$0xff]
    %v1102 = vld [vmem:[#allocation4 + $0x7d8] sm:$0xff]
    %v1103 = vld [vmem:[#allocation4 + $0x7e0] sm:$0xff]
    %v1104 = vld [vmem:[#allocation4 + $0x7e8] sm:$0xff]
    %v1105 = vld [vmem:[#allocation4 + $0x7f0] sm:$0xff]
    %v1106 = vld [vmem:[#allocation4 + $0x7f8] sm:$0xff]
    %v1363 = vunpack.c.l.b16 %v851
    %v1364 = vunpack.c.h.b16 %v851
    %v1365 = vunpack.c.l.b16 %v852
    %v1366 = vunpack.c.h.b16 %v852
    %v1367 = vunpack.c.l.b16 %v853
    %v1368 = vunpack.c.h.b16 %v853
    %v1369 = vunpack.c.l.b16 %v854
    %v1370 = vunpack.c.h.b16 %v854
    %v1371 = vunpack.c.l.b16 %v855
    %v1372 = vunpack.c.h.b16 %v855
    %v1373 = vunpack.c.l.b16 %v856
    %v1374 = vunpack.c.h.b16 %v856
    %v1375 = vunpack.c.l.b16 %v857
    %v1376 = vunpack.c.h.b16 %v857
    %v1377 = vunpack.c.l.b16 %v858
    %v1378 = vunpack.c.h.b16 %v858
    %v1379 = vunpack.c.l.b16 %v859
    %v1380 = vunpack.c.h.b16 %v859
    %v1381 = vunpack.c.l.b16 %v860
    %v1382 = vunpack.c.h.b16 %v860
    %v1383 = vunpack.c.l.b16 %v861
    %v1384 = vunpack.c.h.b16 %v861
    %v1385 = vunpack.c.l.b16 %v862
    %v1386 = vunpack.c.h.b16 %v862
    %v1387 = vunpack.c.l.b16 %v863
    %v1388 = vunpack.c.h.b16 %v863
    %v1389 = vunpack.c.l.b16 %v864
    %v1390 = vunpack.c.h.b16 %v864
    %v1391 = vunpack.c.l.b16 %v865
    %v1392 = vunpack.c.h.b16 %v865
    %v1393 = vunpack.c.l.b16 %v866
    %v1394 = vunpack.c.h.b16 %v866
    %v1395 = vunpack.c.l.b16 %v867
    %v1396 = vunpack.c.h.b16 %v867
    %v1397 = vunpack.c.l.b16 %v868
    %v1398 = vunpack.c.h.b16 %v868
    %v1399 = vunpack.c.l.b16 %v869
    %v1400 = vunpack.c.h.b16 %v869
    %v1401 = vunpack.c.l.b16 %v870
    %v1402 = vunpack.c.h.b16 %v870
    %v1403 = vunpack.c.l.b16 %v871
    %v1404 = vunpack.c.h.b16 %v871
    %v1405 = vunpack.c.l.b16 %v872
    %v1406 = vunpack.c.h.b16 %v872
    %v1407 = vunpack.c.l.b16 %v873
    %v1408 = vunpack.c.h.b16 %v873
    %v1409 = vunpack.c.l.b16 %v874
    %v1410 = vunpack.c.h.b16 %v874
    %v1411 = vunpack.c.l.b16 %v875
    %v1412 = vunpack.c.h.b16 %v875
    %v1413 = vunpack.c.l.b16 %v876
    %v1414 = vunpack.c.h.b16 %v876
    %v1415 = vunpack.c.l.b16 %v877
    %v1416 = vunpack.c.h.b16 %v877
    %v1417 = vunpack.c.l.b16 %v878
    %v1418 = vunpack.c.h.b16 %v878
    %v1419 = vunpack.c.l.b16 %v879
    %v1420 = vunpack.c.h.b16 %v879
    %v1421 = vunpack.c.l.b16 %v880
    %v1422 = vunpack.c.h.b16 %v880
    %v1423 = vunpack.c.l.b16 %v881
    %v1424 = vunpack.c.h.b16 %v881
    %v1425 = vunpack.c.l.b16 %v882
    %v1426 = vunpack.c.h.b16 %v882
    %v1427 = vunpack.c.l.b16 %v883
    %v1428 = vunpack.c.h.b16 %v883
    %v1429 = vunpack.c.l.b16 %v884
    %v1430 = vunpack.c.h.b16 %v884
    %v1431 = vunpack.c.l.b16 %v885
    %v1432 = vunpack.c.h.b16 %v885
    %v1433 = vunpack.c.l.b16 %v886
    %v1434 = vunpack.c.h.b16 %v886
    %v1435 = vunpack.c.l.b16 %v887
    %v1436 = vunpack.c.h.b16 %v887
    %v1437 = vunpack.c.l.b16 %v888
    %v1438 = vunpack.c.h.b16 %v888
    %v1439 = vunpack.c.l.b16 %v889
    %v1440 = vunpack.c.h.b16 %v889
    %v1441 = vunpack.c.l.b16 %v890
    %v1442 = vunpack.c.h.b16 %v890
    %v1443 = vunpack.c.l.b16 %v891
    %v1444 = vunpack.c.h.b16 %v891
    %v1445 = vunpack.c.l.b16 %v892
    %v1446 = vunpack.c.h.b16 %v892
    %v1447 = vunpack.c.l.b16 %v893
    %v1448 = vunpack.c.h.b16 %v893
    %v1449 = vunpack.c.l.b16 %v894
    %v1450 = vunpack.c.h.b16 %v894
    %v1451 = vunpack.c.l.b16 %v895
    %v1452 = vunpack.c.h.b16 %v895
    %v1453 = vunpack.c.l.b16 %v896
    %v1454 = vunpack.c.h.b16 %v896
    %v1455 = vunpack.c.l.b16 %v897
    %v1456 = vunpack.c.h.b16 %v897
    %v1457 = vunpack.c.l.b16 %v898
    %v1458 = vunpack.c.h.b16 %v898
    %v1459 = vunpack.c.l.b16 %v899
    %v1460 = vunpack.c.h.b16 %v899
    %v1461 = vunpack.c.l.b16 %v900
    %v1462 = vunpack.c.h.b16 %v900
    %v1463 = vunpack.c.l.b16 %v901
    %v1464 = vunpack.c.h.b16 %v901
    %v1465 = vunpack.c.l.b16 %v902
    %v1466 = vunpack.c.h.b16 %v902
    %v1467 = vunpack.c.l.b16 %v903
    %v1468 = vunpack.c.h.b16 %v903
    %v1469 = vunpack.c.l.b16 %v904
    %v1470 = vunpack.c.h.b16 %v904
    %v1471 = vunpack.c.l.b16 %v905
    %v1472 = vunpack.c.h.b16 %v905
    %v1473 = vunpack.c.l.b16 %v906
    %v1474 = vunpack.c.h.b16 %v906
    %v1475 = vunpack.c.l.b16 %v907
    %v1476 = vunpack.c.h.b16 %v907
    %v1477 = vunpack.c.l.b16 %v908
    %v1478 = vunpack.c.h.b16 %v908
    %v1479 = vunpack.c.l.b16 %v909
    %v1480 = vunpack.c.h.b16 %v909
    %v1481 = vunpack.c.l.b16 %v910
    %v1482 = vunpack.c.h.b16 %v910
    %v1483 = vunpack.c.l.b16 %v911
    %v1484 = vunpack.c.h.b16 %v911
    %v1485 = vunpack.c.l.b16 %v912
    %v1486 = vunpack.c.h.b16 %v912
    %v1487 = vunpack.c.l.b16 %v913
    %v1488 = vunpack.c.h.b16 %v913
    %v1489 = vunpack.c.l.b16 %v914
    %v1490 = vunpack.c.h.b16 %v914
    %v1491 = vunpack.c.l.b16 %v915
    %v1492 = vunpack.c.h.b16 %v915
    %v1493 = vunpack.c.l.b16 %v916
    %v1494 = vunpack.c.h.b16 %v916
    %v1495 = vunpack.c.l.b16 %v917
    %v1496 = vunpack.c.h.b16 %v917
    %v1497 = vunpack.c.l.b16 %v918
    %v1498 = vunpack.c.h.b16 %v918
    %v1499 = vunpack.c.l.b16 %v919
    %v1500 = vunpack.c.h.b16 %v919
    %v1501 = vunpack.c.l.b16 %v920
    %v1502 = vunpack.c.h.b16 %v920
    %v1503 = vunpack.c.l.b16 %v921
    %v1504 = vunpack.c.h.b16 %v921
    %v1505 = vunpack.c.l.b16 %v922
    %v1506 = vunpack.c.h.b16 %v922
    %v1507 = vunpack.c.l.b16 %v923
    %v1508 = vunpack.c.h.b16 %v923
    %v1509 = vunpack.c.l.b16 %v924
    %v1510 = vunpack.c.h.b16 %v924
    %v1511 = vunpack.c.l.b16 %v925
    %v1512 = vunpack.c.h.b16 %v925
    %v1513 = vunpack.c.l.b16 %v926
    %v1514 = vunpack.c.h.b16 %v926
    %v1515 = vunpack.c.l.b16 %v927
    %v1516 = vunpack.c.h.b16 %v927
    %v1517 = vunpack.c.l.b16 %v928
    %v1518 = vunpack.c.h.b16 %v928
    %v1519 = vunpack.c.l.b16 %v929
    %v1520 = vunpack.c.h.b16 %v929
    %v1521 = vunpack.c.l.b16 %v930
    %v1522 = vunpack.c.h.b16 %v930
    %v1523 = vunpack.c.l.b16 %v931
    %v1524 = vunpack.c.h.b16 %v931
    %v1525 = vunpack.c.l.b16 %v932
    %v1526 = vunpack.c.h.b16 %v932
    %v1527 = vunpack.c.l.b16 %v933
    %v1528 = vunpack.c.h.b16 %v933
    %v1529 = vunpack.c.l.b16 %v934
    %v1530 = vunpack.c.h.b16 %v934
    %v1531 = vunpack.c.l.b16 %v935
    %v1532 = vunpack.c.h.b16 %v935
    %v1533 = vunpack.c.l.b16 %v936
    %v1534 = vunpack.c.h.b16 %v936
    %v1535 = vunpack.c.l.b16 %v937
    %v1536 = vunpack.c.h.b16 %v937
    %v1537 = vunpack.c.l.b16 %v938
    %v1538 = vunpack.c.h.b16 %v938
    %v1539 = vunpack.c.l.b16 %v939
    %v1540 = vunpack.c.h.b16 %v939
    %v1541 = vunpack.c.l.b16 %v940
    %v1542 = vunpack.c.h.b16 %v940
    %v1543 = vunpack.c.l.b16 %v941
    %v1544 = vunpack.c.h.b16 %v941
    %v1545 = vunpack.c.l.b16 %v942
    %v1546 = vunpack.c.h.b16 %v942
    %v1547 = vunpack.c.l.b16 %v943
    %v1548 = vunpack.c.h.b16 %v943
    %v1549 = vunpack.c.l.b16 %v944
    %v1550 = vunpack.c.h.b16 %v944
    %v1551 = vunpack.c.l.b16 %v945
    %v1552 = vunpack.c.h.b16 %v945
    %v1553 = vunpack.c.l.b16 %v946
    %v1554 = vunpack.c.h.b16 %v946
    %v1555 = vunpack.c.l.b16 %v947
    %v1556 = vunpack.c.h.b16 %v947
    %v1557 = vunpack.c.l.b16 %v948
    %v1558 = vunpack.c.h.b16 %v948
    %v1559 = vunpack.c.l.b16 %v949
    %v1560 = vunpack.c.h.b16 %v949
    %v1561 = vunpack.c.l.b16 %v950
    %v1562 = vunpack.c.h.b16 %v950
    %v1563 = vunpack.c.l.b16 %v951
    %v1564 = vunpack.c.h.b16 %v951
    %v1565 = vunpack.c.l.b16 %v952
    %v1566 = vunpack.c.h.b16 %v952
    %v1567 = vunpack.c.l.b16 %v953
    %v1568 = vunpack.c.h.b16 %v953
    %v1569 = vunpack.c.l.b16 %v954
    %v1570 = vunpack.c.h.b16 %v954
    %v1571 = vunpack.c.l.b16 %v955
    %v1572 = vunpack.c.h.b16 %v955
    %v1573 = vunpack.c.l.b16 %v956
    %v1574 = vunpack.c.h.b16 %v956
    %v1575 = vunpack.c.l.b16 %v957
    %v1576 = vunpack.c.h.b16 %v957
    %v1577 = vunpack.c.l.b16 %v958
    %v1578 = vunpack.c.h.b16 %v958
    %v1579 = vunpack.c.l.b16 %v959
    %v1580 = vunpack.c.h.b16 %v959
    %v1581 = vunpack.c.l.b16 %v960
    %v1582 = vunpack.c.h.b16 %v960
    %v1583 = vunpack.c.l.b16 %v961
    %v1584 = vunpack.c.h.b16 %v961
    %v1585 = vunpack.c.l.b16 %v962
    %v1586 = vunpack.c.h.b16 %v962
    %v1587 = vunpack.c.l.b16 %v963
    %v1588 = vunpack.c.h.b16 %v963
    %v1589 = vunpack.c.l.b16 %v964
    %v1590 = vunpack.c.h.b16 %v964
    %v1591 = vunpack.c.l.b16 %v965
    %v1592 = vunpack.c.h.b16 %v965
    %v1593 = vunpack.c.l.b16 %v966
    %v1594 = vunpack.c.h.b16 %v966
    %v1595 = vunpack.c.l.b16 %v967
    %v1596 = vunpack.c.h.b16 %v967
    %v1597 = vunpack.c.l.b16 %v968
    %v1598 = vunpack.c.h.b16 %v968
    %v1599 = vunpack.c.l.b16 %v969
    %v1600 = vunpack.c.h.b16 %v969
    %v1601 = vunpack.c.l.b16 %v970
    %v1602 = vunpack.c.h.b16 %v970
    %v1603 = vunpack.c.l.b16 %v971
    %v1604 = vunpack.c.h.b16 %v971
    %v1605 = vunpack.c.l.b16 %v972
    %v1606 = vunpack.c.h.b16 %v972
    %v1607 = vunpack.c.l.b16 %v973
    %v1608 = vunpack.c.h.b16 %v973
    %v1609 = vunpack.c.l.b16 %v974
    %v1610 = vunpack.c.h.b16 %v974
    %v1611 = vunpack.c.l.b16 %v975
    %v1612 = vunpack.c.h.b16 %v975
    %v1613 = vunpack.c.l.b16 %v976
    %v1614 = vunpack.c.h.b16 %v976
    %v1615 = vunpack.c.l.b16 %v977
    %v1616 = vunpack.c.h.b16 %v977
    %v1617 = vunpack.c.l.b16 %v978
    %v1618 = vunpack.c.h.b16 %v978
    %v1619 = vunpack.c.l.b16 %v979
    %v1620 = vunpack.c.h.b16 %v979
    %v1621 = vunpack.c.l.b16 %v980
    %v1622 = vunpack.c.h.b16 %v980
    %v1623 = vunpack.c.l.b16 %v981
    %v1624 = vunpack.c.h.b16 %v981
    %v1625 = vunpack.c.l.b16 %v982
    %v1626 = vunpack.c.h.b16 %v982
    %v1627 = vunpack.c.l.b16 %v983
    %v1628 = vunpack.c.h.b16 %v983
    %v1629 = vunpack.c.l.b16 %v984
    %v1630 = vunpack.c.h.b16 %v984
    %v1631 = vunpack.c.l.b16 %v985
    %v1632 = vunpack.c.h.b16 %v985
    %v1633 = vunpack.c.l.b16 %v986
    %v1634 = vunpack.c.h.b16 %v986
    %v1635 = vunpack.c.l.b16 %v987
    %v1636 = vunpack.c.h.b16 %v987
    %v1637 = vunpack.c.l.b16 %v988
    %v1638 = vunpack.c.h.b16 %v988
    %v1639 = vunpack.c.l.b16 %v989
    %v1640 = vunpack.c.h.b16 %v989
    %v1641 = vunpack.c.l.b16 %v990
    %v1642 = vunpack.c.h.b16 %v990
    %v1643 = vunpack.c.l.b16 %v991
    %v1644 = vunpack.c.h.b16 %v991
    %v1645 = vunpack.c.l.b16 %v992
    %v1646 = vunpack.c.h.b16 %v992
    %v1647 = vunpack.c.l.b16 %v993
    %v1648 = vunpack.c.h.b16 %v993
    %v1649 = vunpack.c.l.b16 %v994
    %v1650 = vunpack.c.h.b16 %v994
    %v1651 = vunpack.c.l.b16 %v995
    %v1652 = vunpack.c.h.b16 %v995
    %v1653 = vunpack.c.l.b16 %v996
    %v1654 = vunpack.c.h.b16 %v996
    %v1655 = vunpack.c.l.b16 %v997
    %v1656 = vunpack.c.h.b16 %v997
    %v1657 = vunpack.c.l.b16 %v998
    %v1658 = vunpack.c.h.b16 %v998
    %v1659 = vunpack.c.l.b16 %v999
    %v1660 = vunpack.c.h.b16 %v999
    %v1661 = vunpack.c.l.b16 %v1000
    %v1662 = vunpack.c.h.b16 %v1000
    %v1663 = vunpack.c.l.b16 %v1001
    %v1664 = vunpack.c.h.b16 %v1001
    %v1665 = vunpack.c.l.b16 %v1002
    %v1666 = vunpack.c.h.b16 %v1002
    %v1667 = vunpack.c.l.b16 %v1003
    %v1668 = vunpack.c.h.b16 %v1003
    %v1669 = vunpack.c.l.b16 %v1004
    %v1670 = vunpack.c.h.b16 %v1004
    %v1671 = vunpack.c.l.b16 %v1005
    %v1672 = vunpack.c.h.b16 %v1005
    %v1673 = vunpack.c.l.b16 %v1006
    %v1674 = vunpack.c.h.b16 %v1006
    %v1675 = vunpack.c.l.b16 %v1007
    %v1676 = vunpack.c.h.b16 %v1007
    %v1677 = vunpack.c.l.b16 %v1008
    %v1678 = vunpack.c.h.b16 %v1008
    %v1679 = vunpack.c.l.b16 %v1009
    %v1680 = vunpack.c.h.b16 %v1009
    %v1681 = vunpack.c.l.b16 %v1010
    %v1682 = vunpack.c.h.b16 %v1010
    %v1683 = vunpack.c.l.b16 %v1011
    %v1684 = vunpack.c.h.b16 %v1011
    %v1685 = vunpack.c.l.b16 %v1012
    %v1686 = vunpack.c.h.b16 %v1012
    %v1687 = vunpack.c.l.b16 %v1013
    %v1688 = vunpack.c.h.b16 %v1013
    %v1689 = vunpack.c.l.b16 %v1014
    %v1690 = vunpack.c.h.b16 %v1014
    %v1691 = vunpack.c.l.b16 %v1015
    %v1692 = vunpack.c.h.b16 %v1015
    %v1693 = vunpack.c.l.b16 %v1016
    %v1694 = vunpack.c.h.b16 %v1016
    %v1695 = vunpack.c.l.b16 %v1017
    %v1696 = vunpack.c.h.b16 %v1017
    %v1697 = vunpack.c.l.b16 %v1018
    %v1698 = vunpack.c.h.b16 %v1018
    %v1699 = vunpack.c.l.b16 %v1019
    %v1700 = vunpack.c.h.b16 %v1019
    %v1701 = vunpack.c.l.b16 %v1020
    %v1702 = vunpack.c.h.b16 %v1020
    %v1703 = vunpack.c.l.b16 %v1021
    %v1704 = vunpack.c.h.b16 %v1021
    %v1705 = vunpack.c.l.b16 %v1022
    %v1706 = vunpack.c.h.b16 %v1022
    %v1707 = vunpack.c.l.b16 %v1023
    %v1708 = vunpack.c.h.b16 %v1023
    %v1709 = vunpack.c.l.b16 %v1024
    %v1710 = vunpack.c.h.b16 %v1024
    %v1711 = vunpack.c.l.b16 %v1025
    %v1712 = vunpack.c.h.b16 %v1025
    %v1713 = vunpack.c.l.b16 %v1026
    %v1714 = vunpack.c.h.b16 %v1026
    %v1715 = vunpack.c.l.b16 %v1027
    %v1716 = vunpack.c.h.b16 %v1027
    %v1717 = vunpack.c.l.b16 %v1028
    %v1718 = vunpack.c.h.b16 %v1028
    %v1719 = vunpack.c.l.b16 %v1029
    %v1720 = vunpack.c.h.b16 %v1029
    %v1721 = vunpack.c.l.b16 %v1030
    %v1722 = vunpack.c.h.b16 %v1030
    %v1723 = vunpack.c.l.b16 %v1031
    %v1724 = vunpack.c.h.b16 %v1031
    %v1725 = vunpack.c.l.b16 %v1032
    %v1726 = vunpack.c.h.b16 %v1032
    %v1727 = vunpack.c.l.b16 %v1033
    %v1728 = vunpack.c.h.b16 %v1033
    %v1729 = vunpack.c.l.b16 %v1034
    %v1730 = vunpack.c.h.b16 %v1034
    %v1731 = vunpack.c.l.b16 %v1035
    %v1732 = vunpack.c.h.b16 %v1035
    %v1733 = vunpack.c.l.b16 %v1036
    %v1734 = vunpack.c.h.b16 %v1036
    %v1735 = vunpack.c.l.b16 %v1037
    %v1736 = vunpack.c.h.b16 %v1037
    %v1737 = vunpack.c.l.b16 %v1038
    %v1738 = vunpack.c.h.b16 %v1038
    %v1739 = vunpack.c.l.b16 %v1039
    %v1740 = vunpack.c.h.b16 %v1039
    %v1741 = vunpack.c.l.b16 %v1040
    %v1742 = vunpack.c.h.b16 %v1040
    %v1743 = vunpack.c.l.b16 %v1041
    %v1744 = vunpack.c.h.b16 %v1041
    %v1745 = vunpack.c.l.b16 %v1042
    %v1746 = vunpack.c.h.b16 %v1042
    %v1747 = vunpack.c.l.b16 %v1043
    %v1748 = vunpack.c.h.b16 %v1043
    %v1749 = vunpack.c.l.b16 %v1044
    %v1750 = vunpack.c.h.b16 %v1044
    %v1751 = vunpack.c.l.b16 %v1045
    %v1752 = vunpack.c.h.b16 %v1045
    %v1753 = vunpack.c.l.b16 %v1046
    %v1754 = vunpack.c.h.b16 %v1046
    %v1755 = vunpack.c.l.b16 %v1047
    %v1756 = vunpack.c.h.b16 %v1047
    %v1757 = vunpack.c.l.b16 %v1048
    %v1758 = vunpack.c.h.b16 %v1048
    %v1759 = vunpack.c.l.b16 %v1049
    %v1760 = vunpack.c.h.b16 %v1049
    %v1761 = vunpack.c.l.b16 %v1050
    %v1762 = vunpack.c.h.b16 %v1050
    %v1763 = vunpack.c.l.b16 %v1051
    %v1764 = vunpack.c.h.b16 %v1051
    %v1765 = vunpack.c.l.b16 %v1052
    %v1766 = vunpack.c.h.b16 %v1052
    %v1767 = vunpack.c.l.b16 %v1053
    %v1768 = vunpack.c.h.b16 %v1053
    %v1769 = vunpack.c.l.b16 %v1054
    %v1770 = vunpack.c.h.b16 %v1054
    %v1771 = vunpack.c.l.b16 %v1055
    %v1772 = vunpack.c.h.b16 %v1055
    %v1773 = vunpack.c.l.b16 %v1056
    %v1774 = vunpack.c.h.b16 %v1056
    %v1775 = vunpack.c.l.b16 %v1057
    %v1776 = vunpack.c.h.b16 %v1057
    %v1777 = vunpack.c.l.b16 %v1058
    %v1778 = vunpack.c.h.b16 %v1058
    %v1779 = vunpack.c.l.b16 %v1059
    %v1780 = vunpack.c.h.b16 %v1059
    %v1781 = vunpack.c.l.b16 %v1060
    %v1782 = vunpack.c.h.b16 %v1060
    %v1783 = vunpack.c.l.b16 %v1061
    %v1784 = vunpack.c.h.b16 %v1061
    %v1785 = vunpack.c.l.b16 %v1062
    %v1786 = vunpack.c.h.b16 %v1062
    %v1787 = vunpack.c.l.b16 %v1063
    %v1788 = vunpack.c.h.b16 %v1063
    %v1789 = vunpack.c.l.b16 %v1064
    %v1790 = vunpack.c.h.b16 %v1064
    %v1791 = vunpack.c.l.b16 %v1065
    %v1792 = vunpack.c.h.b16 %v1065
    %v1793 = vunpack.c.l.b16 %v1066
    %v1794 = vunpack.c.h.b16 %v1066
    %v1795 = vunpack.c.l.b16 %v1067
    %v1796 = vunpack.c.h.b16 %v1067
    %v1797 = vunpack.c.l.b16 %v1068
    %v1798 = vunpack.c.h.b16 %v1068
    %v1799 = vunpack.c.l.b16 %v1069
    %v1800 = vunpack.c.h.b16 %v1069
    %v1801 = vunpack.c.l.b16 %v1070
    %v1802 = vunpack.c.h.b16 %v1070
    %v1803 = vunpack.c.l.b16 %v1071
    %v1804 = vunpack.c.h.b16 %v1071
    %v1805 = vunpack.c.l.b16 %v1072
    %v1806 = vunpack.c.h.b16 %v1072
    %v1807 = vunpack.c.l.b16 %v1073
    %v1808 = vunpack.c.h.b16 %v1073
    %v1809 = vunpack.c.l.b16 %v1074
    %v1810 = vunpack.c.h.b16 %v1074
    %v1811 = vunpack.c.l.b16 %v1075
    %v1812 = vunpack.c.h.b16 %v1075
    %v1813 = vunpack.c.l.b16 %v1076
    %v1814 = vunpack.c.h.b16 %v1076
    %v1815 = vunpack.c.l.b16 %v1077
    %v1816 = vunpack.c.h.b16 %v1077
    %v1817 = vunpack.c.l.b16 %v1078
    %v1818 = vunpack.c.h.b16 %v1078
    %v1819 = vunpack.c.l.b16 %v1079
    %v1820 = vunpack.c.h.b16 %v1079
    %v1821 = vunpack.c.l.b16 %v1080
    %v1822 = vunpack.c.h.b16 %v1080
    %v1823 = vunpack.c.l.b16 %v1081
    %v1824 = vunpack.c.h.b16 %v1081
    %v1825 = vunpack.c.l.b16 %v1082
    %v1826 = vunpack.c.h.b16 %v1082
    %v1827 = vunpack.c.l.b16 %v1083
    %v1828 = vunpack.c.h.b16 %v1083
    %v1829 = vunpack.c.l.b16 %v1084
    %v1830 = vunpack.c.h.b16 %v1084
    %v1831 = vunpack.c.l.b16 %v1085
    %v1832 = vunpack.c.h.b16 %v1085
    %v1833 = vunpack.c.l.b16 %v1086
    %v1834 = vunpack.c.h.b16 %v1086
    %v1835 = vunpack.c.l.b16 %v1087
    %v1836 = vunpack.c.h.b16 %v1087
    %v1837 = vunpack.c.l.b16 %v1088
    %v1838 = vunpack.c.h.b16 %v1088
    %v1839 = vunpack.c.l.b16 %v1089
    %v1840 = vunpack.c.h.b16 %v1089
    %v1841 = vunpack.c.l.b16 %v1090
    %v1842 = vunpack.c.h.b16 %v1090
    %v1843 = vunpack.c.l.b16 %v1091
    %v1844 = vunpack.c.h.b16 %v1091
    %v1845 = vunpack.c.l.b16 %v1092
    %v1846 = vunpack.c.h.b16 %v1092
    %v1847 = vunpack.c.l.b16 %v1093
    %v1848 = vunpack.c.h.b16 %v1093
    %v1849 = vunpack.c.l.b16 %v1094
    %v1850 = vunpack.c.h.b16 %v1094
    %v1851 = vunpack.c.l.b16 %v1095
    %v1852 = vunpack.c.h.b16 %v1095
    %v1853 = vunpack.c.l.b16 %v1096
    %v1854 = vunpack.c.h.b16 %v1096
    %v1855 = vunpack.c.l.b16 %v1097
    %v1856 = vunpack.c.h.b16 %v1097
    %v1857 = vunpack.c.l.b16 %v1098
    %v1858 = vunpack.c.h.b16 %v1098
    %v1859 = vunpack.c.l.b16 %v1099
    %v1860 = vunpack.c.h.b16 %v1099
    %v1861 = vunpack.c.l.b16 %v1100
    %v1862 = vunpack.c.h.b16 %v1100
    %v1863 = vunpack.c.l.b16 %v1101
    %v1864 = vunpack.c.h.b16 %v1101
    %v1865 = vunpack.c.l.b16 %v1102
    %v1866 = vunpack.c.h.b16 %v1102
    %v1867 = vunpack.c.l.b16 %v1103
    %v1868 = vunpack.c.h.b16 %v1103
    %v1869 = vunpack.c.l.b16 %v1104
    %v1870 = vunpack.c.h.b16 %v1104
    %v1871 = vunpack.c.l.b16 %v1105
    %v1872 = vunpack.c.h.b16 %v1105
    %v1873 = vunpack.c.l.b16 %v1106
    %v1874 = vunpack.c.h.b16 %v1106
    %v1875 = vpack.c.b16 %v1371, %v1363
    %v1876 = vpack.c.b16 %v1372, %v1364
    %v1877 = vpack.c.b16 %v1373, %v1365
    %v1878 = vpack.c.b16 %v1374, %v1366
    %v1879 = vpack.c.b16 %v1375, %v1367
    %v1880 = vpack.c.b16 %v1376, %v1368
    %v1881 = vpack.c.b16 %v1377, %v1369
    %v1882 = vpack.c.b16 %v1378, %v1370
    %v1883 = vpack.c.b16 %v1387, %v1379
    %v1884 = vpack.c.b16 %v1388, %v1380
    %v1885 = vpack.c.b16 %v1389, %v1381
    %v1886 = vpack.c.b16 %v1390, %v1382
    %v1887 = vpack.c.b16 %v1391, %v1383
    %v1888 = vpack.c.b16 %v1392, %v1384
    %v1889 = vpack.c.b16 %v1393, %v1385
    %v1890 = vpack.c.b16 %v1394, %v1386
    %v1891 = vpack.c.b16 %v1403, %v1395
    %v1892 = vpack.c.b16 %v1404, %v1396
    %v1893 = vpack.c.b16 %v1405, %v1397
    %v1894 = vpack.c.b16 %v1406, %v1398
    %v1895 = vpack.c.b16 %v1407, %v1399
    %v1896 = vpack.c.b16 %v1408, %v1400
    %v1897 = vpack.c.b16 %v1409, %v1401
    %v1898 = vpack.c.b16 %v1410, %v1402
    %v1899 = vpack.c.b16 %v1419, %v1411
    %v1900 = vpack.c.b16 %v1420, %v1412
    %v1901 = vpack.c.b16 %v1421, %v1413
    %v1902 = vpack.c.b16 %v1422, %v1414
    %v1903 = vpack.c.b16 %v1423, %v1415
    %v1904 = vpack.c.b16 %v1424, %v1416
    %v1905 = vpack.c.b16 %v1425, %v1417
    %v1906 = vpack.c.b16 %v1426, %v1418
    %v1907 = vpack.c.b16 %v1435, %v1427
    %v1908 = vpack.c.b16 %v1436, %v1428
    %v1909 = vpack.c.b16 %v1437, %v1429
    %v1910 = vpack.c.b16 %v1438, %v1430
    %v1911 = vpack.c.b16 %v1439, %v1431
    %v1912 = vpack.c.b16 %v1440, %v1432
    %v1913 = vpack.c.b16 %v1441, %v1433
    %v1914 = vpack.c.b16 %v1442, %v1434
    %v1915 = vpack.c.b16 %v1451, %v1443
    %v1916 = vpack.c.b16 %v1452, %v1444
    %v1917 = vpack.c.b16 %v1453, %v1445
    %v1918 = vpack.c.b16 %v1454, %v1446
    %v1919 = vpack.c.b16 %v1455, %v1447
    %v1920 = vpack.c.b16 %v1456, %v1448
    %v1921 = vpack.c.b16 %v1457, %v1449
    %v1922 = vpack.c.b16 %v1458, %v1450
    %v1923 = vpack.c.b16 %v1467, %v1459
    %v1924 = vpack.c.b16 %v1468, %v1460
    %v1925 = vpack.c.b16 %v1469, %v1461
    %v1926 = vpack.c.b16 %v1470, %v1462
    %v1927 = vpack.c.b16 %v1471, %v1463
    %v1928 = vpack.c.b16 %v1472, %v1464
    %v1929 = vpack.c.b16 %v1473, %v1465
    %v1930 = vpack.c.b16 %v1474, %v1466
    %v1931 = vpack.c.b16 %v1483, %v1475
    %v1932 = vpack.c.b16 %v1484, %v1476
    %v1933 = vpack.c.b16 %v1485, %v1477
    %v1934 = vpack.c.b16 %v1486, %v1478
    %v1935 = vpack.c.b16 %v1487, %v1479
    %v1936 = vpack.c.b16 %v1488, %v1480
    %v1937 = vpack.c.b16 %v1489, %v1481
    %v1938 = vpack.c.b16 %v1490, %v1482
    %v1939 = vpack.c.b16 %v1499, %v1491
    %v1940 = vpack.c.b16 %v1500, %v1492
    %v1941 = vpack.c.b16 %v1501, %v1493
    %v1942 = vpack.c.b16 %v1502, %v1494
    %v1943 = vpack.c.b16 %v1503, %v1495
    %v1944 = vpack.c.b16 %v1504, %v1496
    %v1945 = vpack.c.b16 %v1505, %v1497
    %v1946 = vpack.c.b16 %v1506, %v1498
    %v1947 = vpack.c.b16 %v1515, %v1507
    %v1948 = vpack.c.b16 %v1516, %v1508
    %v1949 = vpack.c.b16 %v1517, %v1509
    %v1950 = vpack.c.b16 %v1518, %v1510
    %v1951 = vpack.c.b16 %v1519, %v1511
    %v1952 = vpack.c.b16 %v1520, %v1512
    %v1953 = vpack.c.b16 %v1521, %v1513
    %v1954 = vpack.c.b16 %v1522, %v1514
    %v1955 = vpack.c.b16 %v1531, %v1523
    %v1956 = vpack.c.b16 %v1532, %v1524
    %v1957 = vpack.c.b16 %v1533, %v1525
    %v1958 = vpack.c.b16 %v1534, %v1526
    %v1959 = vpack.c.b16 %v1535, %v1527
    %v1960 = vpack.c.b16 %v1536, %v1528
    %v1961 = vpack.c.b16 %v1537, %v1529
    %v1962 = vpack.c.b16 %v1538, %v1530
    %v1963 = vpack.c.b16 %v1547, %v1539
    %v1964 = vpack.c.b16 %v1548, %v1540
    %v1965 = vpack.c.b16 %v1549, %v1541
    %v1966 = vpack.c.b16 %v1550, %v1542
    %v1967 = vpack.c.b16 %v1551, %v1543
    %v1968 = vpack.c.b16 %v1552, %v1544
    %v1969 = vpack.c.b16 %v1553, %v1545
    %v1970 = vpack.c.b16 %v1554, %v1546
    %v1971 = vpack.c.b16 %v1563, %v1555
    %v1972 = vpack.c.b16 %v1564, %v1556
    %v1973 = vpack.c.b16 %v1565, %v1557
    %v1974 = vpack.c.b16 %v1566, %v1558
    %v1975 = vpack.c.b16 %v1567, %v1559
    %v1976 = vpack.c.b16 %v1568, %v1560
    %v1977 = vpack.c.b16 %v1569, %v1561
    %v1978 = vpack.c.b16 %v1570, %v1562
    %v1979 = vpack.c.b16 %v1579, %v1571
    %v1980 = vpack.c.b16 %v1580, %v1572
    %v1981 = vpack.c.b16 %v1581, %v1573
    %v1982 = vpack.c.b16 %v1582, %v1574
    %v1983 = vpack.c.b16 %v1583, %v1575
    %v1984 = vpack.c.b16 %v1584, %v1576
    %v1985 = vpack.c.b16 %v1585, %v1577
    %v1986 = vpack.c.b16 %v1586, %v1578
    %v1987 = vpack.c.b16 %v1595, %v1587
    %v1988 = vpack.c.b16 %v1596, %v1588
    %v1989 = vpack.c.b16 %v1597, %v1589
    %v1990 = vpack.c.b16 %v1598, %v1590
    %v1991 = vpack.c.b16 %v1599, %v1591
    %v1992 = vpack.c.b16 %v1600, %v1592
    %v1993 = vpack.c.b16 %v1601, %v1593
    %v1994 = vpack.c.b16 %v1602, %v1594
    %v1995 = vpack.c.b16 %v1611, %v1603
    %v1996 = vpack.c.b16 %v1612, %v1604
    %v1997 = vpack.c.b16 %v1613, %v1605
    %v1998 = vpack.c.b16 %v1614, %v1606
    %v1999 = vpack.c.b16 %v1615, %v1607
    %v2000 = vpack.c.b16 %v1616, %v1608
    %v2001 = vpack.c.b16 %v1617, %v1609
    %v2002 = vpack.c.b16 %v1618, %v1610
    %v2003 = vpack.c.b16 %v1627, %v1619
    %v2004 = vpack.c.b16 %v1628, %v1620
    %v2005 = vpack.c.b16 %v1629, %v1621
    %v2006 = vpack.c.b16 %v1630, %v1622
    %v2007 = vpack.c.b16 %v1631, %v1623
    %v2008 = vpack.c.b16 %v1632, %v1624
    %v2009 = vpack.c.b16 %v1633, %v1625
    %v2010 = vpack.c.b16 %v1634, %v1626
    %v2011 = vpack.c.b16 %v1643, %v1635
    %v2012 = vpack.c.b16 %v1644, %v1636
    %v2013 = vpack.c.b16 %v1645, %v1637
    %v2014 = vpack.c.b16 %v1646, %v1638
    %v2015 = vpack.c.b16 %v1647, %v1639
    %v2016 = vpack.c.b16 %v1648, %v1640
    %v2017 = vpack.c.b16 %v1649, %v1641
    %v2018 = vpack.c.b16 %v1650, %v1642
    %v2019 = vpack.c.b16 %v1659, %v1651
    %v2020 = vpack.c.b16 %v1660, %v1652
    %v2021 = vpack.c.b16 %v1661, %v1653
    %v2022 = vpack.c.b16 %v1662, %v1654
    %v2023 = vpack.c.b16 %v1663, %v1655
    %v2024 = vpack.c.b16 %v1664, %v1656
    %v2025 = vpack.c.b16 %v1665, %v1657
    %v2026 = vpack.c.b16 %v1666, %v1658
    %v2027 = vpack.c.b16 %v1675, %v1667
    %v2028 = vpack.c.b16 %v1676, %v1668
    %v2029 = vpack.c.b16 %v1677, %v1669
    %v2030 = vpack.c.b16 %v1678, %v1670
    %v2031 = vpack.c.b16 %v1679, %v1671
    %v2032 = vpack.c.b16 %v1680, %v1672
    %v2033 = vpack.c.b16 %v1681, %v1673
    %v2034 = vpack.c.b16 %v1682, %v1674
    %v2035 = vpack.c.b16 %v1691, %v1683
    %v2036 = vpack.c.b16 %v1692, %v1684
    %v2037 = vpack.c.b16 %v1693, %v1685
    %v2038 = vpack.c.b16 %v1694, %v1686
    %v2039 = vpack.c.b16 %v1695, %v1687
    %v2040 = vpack.c.b16 %v1696, %v1688
    %v2041 = vpack.c.b16 %v1697, %v1689
    %v2042 = vpack.c.b16 %v1698, %v1690
    %v2043 = vpack.c.b16 %v1707, %v1699
    %v2044 = vpack.c.b16 %v1708, %v1700
    %v2045 = vpack.c.b16 %v1709, %v1701
    %v2046 = vpack.c.b16 %v1710, %v1702
    %v2047 = vpack.c.b16 %v1711, %v1703
    %v2048 = vpack.c.b16 %v1712, %v1704
    %v2049 = vpack.c.b16 %v1713, %v1705
    %v2050 = vpack.c.b16 %v1714, %v1706
    %v2051 = vpack.c.b16 %v1723, %v1715
    %v2052 = vpack.c.b16 %v1724, %v1716
    %v2053 = vpack.c.b16 %v1725, %v1717
    %v2054 = vpack.c.b16 %v1726, %v1718
    %v2055 = vpack.c.b16 %v1727, %v1719
    %v2056 = vpack.c.b16 %v1728, %v1720
    %v2057 = vpack.c.b16 %v1729, %v1721
    %v2058 = vpack.c.b16 %v1730, %v1722
    %v2059 = vpack.c.b16 %v1739, %v1731
    %v2060 = vpack.c.b16 %v1740, %v1732
    %v2061 = vpack.c.b16 %v1741, %v1733
    %v2062 = vpack.c.b16 %v1742, %v1734
    %v2063 = vpack.c.b16 %v1743, %v1735
    %v2064 = vpack.c.b16 %v1744, %v1736
    %v2065 = vpack.c.b16 %v1745, %v1737
    %v2066 = vpack.c.b16 %v1746, %v1738
    %v2067 = vpack.c.b16 %v1755, %v1747
    %v2068 = vpack.c.b16 %v1756, %v1748
    %v2069 = vpack.c.b16 %v1757, %v1749
    %v2070 = vpack.c.b16 %v1758, %v1750
    %v2071 = vpack.c.b16 %v1759, %v1751
    %v2072 = vpack.c.b16 %v1760, %v1752
    %v2073 = vpack.c.b16 %v1761, %v1753
    %v2074 = vpack.c.b16 %v1762, %v1754
    %v2075 = vpack.c.b16 %v1771, %v1763
    %v2076 = vpack.c.b16 %v1772, %v1764
    %v2077 = vpack.c.b16 %v1773, %v1765
    %v2078 = vpack.c.b16 %v1774, %v1766
    %v2079 = vpack.c.b16 %v1775, %v1767
    %v2080 = vpack.c.b16 %v1776, %v1768
    %v2081 = vpack.c.b16 %v1777, %v1769
    %v2082 = vpack.c.b16 %v1778, %v1770
    %v2083 = vpack.c.b16 %v1787, %v1779
    %v2084 = vpack.c.b16 %v1788, %v1780
    %v2085 = vpack.c.b16 %v1789, %v1781
    %v2086 = vpack.c.b16 %v1790, %v1782
    %v2087 = vpack.c.b16 %v1791, %v1783
    %v2088 = vpack.c.b16 %v1792, %v1784
    %v2089 = vpack.c.b16 %v1793, %v1785
    %v2090 = vpack.c.b16 %v1794, %v1786
    %v2091 = vpack.c.b16 %v1803, %v1795
    %v2092 = vpack.c.b16 %v1804, %v1796
    %v2093 = vpack.c.b16 %v1805, %v1797
    %v2094 = vpack.c.b16 %v1806, %v1798
    %v2095 = vpack.c.b16 %v1807, %v1799
    %v2096 = vpack.c.b16 %v1808, %v1800
    %v2097 = vpack.c.b16 %v1809, %v1801
    %v2098 = vpack.c.b16 %v1810, %v1802
    %v2099 = vpack.c.b16 %v1819, %v1811
    %v2100 = vpack.c.b16 %v1820, %v1812
    %v2101 = vpack.c.b16 %v1821, %v1813
    %v2102 = vpack.c.b16 %v1822, %v1814
    %v2103 = vpack.c.b16 %v1823, %v1815
    %v2104 = vpack.c.b16 %v1824, %v1816
    %v2105 = vpack.c.b16 %v1825, %v1817
    %v2106 = vpack.c.b16 %v1826, %v1818
    %v2107 = vpack.c.b16 %v1835, %v1827
    %v2108 = vpack.c.b16 %v1836, %v1828
    %v2109 = vpack.c.b16 %v1837, %v1829
    %v2110 = vpack.c.b16 %v1838, %v1830
    %v2111 = vpack.c.b16 %v1839, %v1831
    %v2112 = vpack.c.b16 %v1840, %v1832
    %v2113 = vpack.c.b16 %v1841, %v1833
    %v2114 = vpack.c.b16 %v1842, %v1834
    %v2115 = vpack.c.b16 %v1851, %v1843
    %v2116 = vpack.c.b16 %v1852, %v1844
    %v2117 = vpack.c.b16 %v1853, %v1845
    %v2118 = vpack.c.b16 %v1854, %v1846
    %v2119 = vpack.c.b16 %v1855, %v1847
    %v2120 = vpack.c.b16 %v1856, %v1848
    %v2121 = vpack.c.b16 %v1857, %v1849
    %v2122 = vpack.c.b16 %v1858, %v1850
    %v2123 = vpack.c.b16 %v1867, %v1859
    %v2124 = vpack.c.b16 %v1868, %v1860
    %v2125 = vpack.c.b16 %v1869, %v1861
    %v2126 = vpack.c.b16 %v1870, %v1862
    %v2127 = vpack.c.b16 %v1871, %v1863
    %v2128 = vpack.c.b16 %v1872, %v1864
    %v2129 = vpack.c.b16 %v1873, %v1865
    %v2130 = vpack.c.b16 %v1874, %v1866
    %2387 = vmatprep.subr.bf16.mxu0 %v1932
    %2388 = vmatpush1.bf16.msra.mxu0 %v1931
    %2389 = vmatprep.subr.bf16.mxu0 %v1924
    %2390 = vmatpush1.bf16.msra.mxu0 %v1923
    %2391 = vmatprep.subr.bf16.mxu0 %v1916
    %2392 = vmatpush1.bf16.msra.mxu0 %v1915
    %2393 = vmatprep.subr.bf16.mxu0 %v1908
    %2394 = vmatpush1.bf16.msra.mxu0 %v1907
    %2395 = vmatprep.subr.bf16.mxu0 %v1900
    %2396 = vmatpush1.bf16.msra.mxu0 %v1899
    %2397 = vmatprep.subr.bf16.mxu0 %v1892
    %2398 = vmatpush1.bf16.msra.mxu0 %v1891
    %2399 = vmatprep.subr.bf16.mxu0 %v1884
    %2400 = vmatpush1.bf16.msra.mxu0 %v1883
    %2401 = vmatprep.subr.bf16.mxu0 %v1876
    %2402 = vmatpush1.bf16.msra.mxu0 %v1875
    %2403 = vmatprep.subr.bf16.mxu0 %v1996
    %2404 = vmatpush2.bf16.msra.mxu0 %v1995
    %2405 = vmatprep.subr.bf16.mxu0 %v1988
    %2406 = vmatpush2.bf16.msra.mxu0 %v1987
    %2407 = vmatprep.subr.bf16.mxu0 %v1980
    %2408 = vmatpush2.bf16.msra.mxu0 %v1979
    %2409 = vmatprep.subr.bf16.mxu0 %v1972
    %2410 = vmatpush2.bf16.msra.mxu0 %v1971
    %2411 = vmatprep.subr.bf16.mxu0 %v1964
    %2412 = vmatpush2.bf16.msra.mxu0 %v1963
    %2413 = vmatprep.subr.bf16.mxu0 %v1956
    %2414 = vmatpush2.bf16.msra.mxu0 %v1955
    %2415 = vmatprep.subr.bf16.mxu0 %v1948
    %2416 = vmatpush2.bf16.msra.mxu0 %v1947
    %2417 = vmatprep.subr.bf16.mxu0 %v1940
    %2418 = vmatpush2.bf16.msra.mxu0 %v1939
    %2419 = vmatprep.mubr.bf16.mxu0 %v848
    %2420 = vmatmul.mubr.bf16.gmra.mxu0 %v847
    %v2421 = vpop.f32.mrf.mxu0
    %v2422 = vadd.f32 0.0, %v2421
    %v2423 = vpop.f32.mrf.mxu0
    %v2424 = vadd.f32 0.0, %v2423
    %v2425 = vpop.f32.mrf.mxu0
    %v2426 = vpop.f32.mrf.mxu0
    %2427 = vdwg.mxu0
    %2428 = vmatprep.subr.bf16.mxu0 %v2060
    %2429 = vmatpush1.bf16.msra.mxu0 %v2059
    %2430 = vmatprep.subr.bf16.mxu0 %v2052
    %2431 = vmatpush1.bf16.msra.mxu0 %v2051
    %2432 = vmatprep.subr.bf16.mxu0 %v2044
    %2433 = vmatpush1.bf16.msra.mxu0 %v2043
    %2434 = vmatprep.subr.bf16.mxu0 %v2036
    %2435 = vmatpush1.bf16.msra.mxu0 %v2035
    %2436 = vmatprep.subr.bf16.mxu0 %v2028
    %2437 = vmatpush1.bf16.msra.mxu0 %v2027
    %2438 = vmatprep.subr.bf16.mxu0 %v2020
    %2439 = vmatpush1.bf16.msra.mxu0 %v2019
    %2440 = vmatprep.subr.bf16.mxu0 %v2012
    %2441 = vmatpush1.bf16.msra.mxu0 %v2011
    %2442 = vmatprep.subr.bf16.mxu0 %v2004
    %2443 = vmatpush1.bf16.msra.mxu0 %v2003
    %2444 = vmatprep.subr.bf16.mxu0 %v2124
    %2445 = vmatpush2.bf16.msra.mxu0 %v2123
    %2446 = vmatprep.subr.bf16.mxu0 %v2116
    %2447 = vmatpush2.bf16.msra.mxu0 %v2115
    %2448 = vmatprep.subr.bf16.mxu0 %v2108
    %2449 = vmatpush2.bf16.msra.mxu0 %v2107
    %2450 = vmatprep.subr.bf16.mxu0 %v2100
    %2451 = vmatpush2.bf16.msra.mxu0 %v2099
    %2452 = vmatprep.subr.bf16.mxu0 %v2092
    %2453 = vmatpush2.bf16.msra.mxu0 %v2091
    %2454 = vmatprep.subr.bf16.mxu0 %v2084
    %2455 = vmatpush2.bf16.msra.mxu0 %v2083
    %2456 = vmatprep.subr.bf16.mxu0 %v2076
    %2457 = vmatpush2.bf16.msra.mxu0 %v2075
    %2458 = vmatprep.subr.bf16.mxu0 %v2068
    %2459 = vmatpush2.bf16.msra.mxu0 %v2067
    %2460 = vmatprep.mubr.bf16.mxu0 %v850
    %2461 = vmatmul.mubr.bf16.gmra.mxu0 %v849
    %v2462 = vpop.f32.mrf.mxu0
    %v2463 = vadd.f32 %v2422, %v2462
    %v2464 = vpop.f32.mrf.mxu0
    %v2465 = vadd.f32 %v2424, %v2464
    %v2466 = vpop.f32.mrf.mxu0
    %v2467 = vpop.f32.mrf.mxu0
    %2468 = vdwg.mxu0
    %2469 = vmatprep.subr.bf16.mxu0 %v1934
    %2470 = vmatpush1.bf16.msra.mxu0 %v1933
    %2471 = vmatprep.subr.bf16.mxu0 %v1926
    %2472 = vmatpush1.bf16.msra.mxu0 %v1925
    %2473 = vmatprep.subr.bf16.mxu0 %v1918
    %2474 = vmatpush1.bf16.msra.mxu0 %v1917
    %2475 = vmatprep.subr.bf16.mxu0 %v1910
    %2476 = vmatpush1.bf16.msra.mxu0 %v1909
    %2477 = vmatprep.subr.bf16.mxu0 %v1902
    %2478 = vmatpush1.bf16.msra.mxu0 %v1901
    %2479 = vmatprep.subr.bf16.mxu0 %v1894
    %2480 = vmatpush1.bf16.msra.mxu0 %v1893
    %2481 = vmatprep.subr.bf16.mxu0 %v1886
    %2482 = vmatpush1.bf16.msra.mxu0 %v1885
    %2483 = vmatprep.subr.bf16.mxu0 %v1878
    %2484 = vmatpush1.bf16.msra.mxu0 %v1877
    %2485 = vmatprep.subr.bf16.mxu0 %v1998
    %2486 = vmatpush2.bf16.msra.mxu0 %v1997
    %2487 = vmatprep.subr.bf16.mxu0 %v1990
    %2488 = vmatpush2.bf16.msra.mxu0 %v1989
    %2489 = vmatprep.subr.bf16.mxu0 %v1982
    %2490 = vmatpush2.bf16.msra.mxu0 %v1981
    %2491 = vmatprep.subr.bf16.mxu0 %v1974
    %2492 = vmatpush2.bf16.msra.mxu0 %v1973
    %2493 = vmatprep.subr.bf16.mxu0 %v1966
    %2494 = vmatpush2.bf16.msra.mxu0 %v1965
    %2495 = vmatprep.subr.bf16.mxu0 %v1958
    %2496 = vmatpush2.bf16.msra.mxu0 %v1957
    %2497 = vmatprep.subr.bf16.mxu0 %v1950
    %2498 = vmatpush2.bf16.msra.mxu0 %v1949
    %2499 = vmatprep.subr.bf16.mxu0 %v1942
    %2500 = vmatpush2.bf16.msra.mxu0 %v1941
    %2501 = vmatprep.mubr.bf16.mxu0 %v848
    %2502 = vmatmul.mubr.bf16.gmra.mxu0 %v847
    %v2503 = vpop.f32.mrf.mxu0
    %v2504 = vadd.f32 0.0, %v2503
    %v2505 = vpop.f32.mrf.mxu0
    %v2506 = vadd.f32 0.0, %v2505
    %v2507 = vpop.f32.mrf.mxu0
    %v2508 = vpop.f32.mrf.mxu0
    %2509 = vdwg.mxu0
    %2510 = vmatprep.subr.bf16.mxu0 %v2062
    %2511 = vmatpush1.bf16.msra.mxu0 %v2061
    %2512 = vmatprep.subr.bf16.mxu0 %v2054
    %2513 = vmatpush1.bf16.msra.mxu0 %v2053
    %2514 = vmatprep.subr.bf16.mxu0 %v2046
    %2515 = vmatpush1.bf16.msra.mxu0 %v2045
    %2516 = vmatprep.subr.bf16.mxu0 %v2038
    %2517 = vmatpush1.bf16.msra.mxu0 %v2037
    %2518 = vmatprep.subr.bf16.mxu0 %v2030
    %2519 = vmatpush1.bf16.msra.mxu0 %v2029
    %2520 = vmatprep.subr.bf16.mxu0 %v2022
    %2521 = vmatpush1.bf16.msra.mxu0 %v2021
    %2522 = vmatprep.subr.bf16.mxu0 %v2014
    %2523 = vmatpush1.bf16.msra.mxu0 %v2013
    %2524 = vmatprep.subr.bf16.mxu0 %v2006
    %2525 = vmatpush1.bf16.msra.mxu0 %v2005
    %2526 = vmatprep.subr.bf16.mxu0 %v2126
    %2527 = vmatpush2.bf16.msra.mxu0 %v2125
    %2528 = vmatprep.subr.bf16.mxu0 %v2118
    %2529 = vmatpush2.bf16.msra.mxu0 %v2117
    %2530 = vmatprep.subr.bf16.mxu0 %v2110
    %2531 = vmatpush2.bf16.msra.mxu0 %v2109
    %2532 = vmatprep.subr.bf16.mxu0 %v2102
    %2533 = vmatpush2.bf16.msra.mxu0 %v2101
    %2534 = vmatprep.subr.bf16.mxu0 %v2094
    %2535 = vmatpush2.bf16.msra.mxu0 %v2093
    %2536 = vmatprep.subr.bf16.mxu0 %v2086
    %2537 = vmatpush2.bf16.msra.mxu0 %v2085
    %2538 = vmatprep.subr.bf16.mxu0 %v2078
    %2539 = vmatpush2.bf16.msra.mxu0 %v2077
    %2540 = vmatprep.subr.bf16.mxu0 %v2070
    %2541 = vmatpush2.bf16.msra.mxu0 %v2069
    %2542 = vmatprep.mubr.bf16.mxu0 %v850
    %2543 = vmatmul.mubr.bf16.gmra.mxu0 %v849
    %v2544 = vpop.f32.mrf.mxu0
    %v2545 = vadd.f32 %v2504, %v2544
    %v2546 = vpop.f32.mrf.mxu0
    %v2547 = vadd.f32 %v2506, %v2546
    %v2548 = vpop.f32.mrf.mxu0
    %v2549 = vpop.f32.mrf.mxu0
    %2550 = vdwg.mxu0
    %2551 = vmatprep.subr.bf16.mxu0 %v1936
    %2552 = vmatpush1.bf16.msra.mxu0 %v1935
    %2553 = vmatprep.subr.bf16.mxu0 %v1928
    %2554 = vmatpush1.bf16.msra.mxu0 %v1927
    %2555 = vmatprep.subr.bf16.mxu0 %v1920
    %2556 = vmatpush1.bf16.msra.mxu0 %v1919
    %2557 = vmatprep.subr.bf16.mxu0 %v1912
    %2558 = vmatpush1.bf16.msra.mxu0 %v1911
    %2559 = vmatprep.subr.bf16.mxu0 %v1904
    %2560 = vmatpush1.bf16.msra.mxu0 %v1903
    %2561 = vmatprep.subr.bf16.mxu0 %v1896
    %2562 = vmatpush1.bf16.msra.mxu0 %v1895
    %2563 = vmatprep.subr.bf16.mxu0 %v1888
    %2564 = vmatpush1.bf16.msra.mxu0 %v1887
    %2565 = vmatprep.subr.bf16.mxu0 %v1880
    %2566 = vmatpush1.bf16.msra.mxu0 %v1879
    %2567 = vmatprep.subr.bf16.mxu0 %v2000
    %2568 = vmatpush2.bf16.msra.mxu0 %v1999
    %2569 = vmatprep.subr.bf16.mxu0 %v1992
    %2570 = vmatpush2.bf16.msra.mxu0 %v1991
    %2571 = vmatprep.subr.bf16.mxu0 %v1984
    %2572 = vmatpush2.bf16.msra.mxu0 %v1983
    %2573 = vmatprep.subr.bf16.mxu0 %v1976
    %2574 = vmatpush2.bf16.msra.mxu0 %v1975
    %2575 = vmatprep.subr.bf16.mxu0 %v1968
    %2576 = vmatpush2.bf16.msra.mxu0 %v1967
    %2577 = vmatprep.subr.bf16.mxu0 %v1960
    %2578 = vmatpush2.bf16.msra.mxu0 %v1959
    %2579 = vmatprep.subr.bf16.mxu0 %v1952
    %2580 = vmatpush2.bf16.msra.mxu0 %v1951
    %2581 = vmatprep.subr.bf16.mxu0 %v1944
    %2582 = vmatpush2.bf16.msra.mxu0 %v1943
    %2583 = vmatprep.mubr.bf16.mxu0 %v848
    %2584 = vmatmul.mubr.bf16.gmra.mxu0 %v847
    %v2585 = vpop.f32.mrf.mxu0
    %v2586 = vadd.f32 0.0, %v2585
    %v2587 = vpop.f32.mrf.mxu0
    %v2588 = vadd.f32 0.0, %v2587
    %v2589 = vpop.f32.mrf.mxu0
    %v2590 = vpop.f32.mrf.mxu0
    %2591 = vdwg.mxu0
    %2592 = vmatprep.subr.bf16.mxu0 %v2064
    %2593 = vmatpush1.bf16.msra.mxu0 %v2063
    %2594 = vmatprep.subr.bf16.mxu0 %v2056
    %2595 = vmatpush1.bf16.msra.mxu0 %v2055
    %2596 = vmatprep.subr.bf16.mxu0 %v2048
    %2597 = vmatpush1.bf16.msra.mxu0 %v2047
    %2598 = vmatprep.subr.bf16.mxu0 %v2040
    %2599 = vmatpush1.bf16.msra.mxu0 %v2039
    %2600 = vmatprep.subr.bf16.mxu0 %v2032
    %2601 = vmatpush1.bf16.msra.mxu0 %v2031
    %2602 = vmatprep.subr.bf16.mxu0 %v2024
    %2603 = vmatpush1.bf16.msra.mxu0 %v2023
    %2604 = vmatprep.subr.bf16.mxu0 %v2016
    %2605 = vmatpush1.bf16.msra.mxu0 %v2015
    %2606 = vmatprep.subr.bf16.mxu0 %v2008
    %2607 = vmatpush1.bf16.msra.mxu0 %v2007
    %2608 = vmatprep.subr.bf16.mxu0 %v2128
    %2609 = vmatpush2.bf16.msra.mxu0 %v2127
    %2610 = vmatprep.subr.bf16.mxu0 %v2120
    %2611 = vmatpush2.bf16.msra.mxu0 %v2119
    %2612 = vmatprep.subr.bf16.mxu0 %v2112
    %2613 = vmatpush2.bf16.msra.mxu0 %v2111
    %2614 = vmatprep.subr.bf16.mxu0 %v2104
    %2615 = vmatpush2.bf16.msra.mxu0 %v2103
    %2616 = vmatprep.subr.bf16.mxu0 %v2096
    %2617 = vmatpush2.bf16.msra.mxu0 %v2095
    %2618 = vmatprep.subr.bf16.mxu0 %v2088
    %2619 = vmatpush2.bf16.msra.mxu0 %v2087
    %2620 = vmatprep.subr.bf16.mxu0 %v2080
    %2621 = vmatpush2.bf16.msra.mxu0 %v2079
    %2622 = vmatprep.subr.bf16.mxu0 %v2072
    %2623 = vmatpush2.bf16.msra.mxu0 %v2071
    %2624 = vmatprep.mubr.bf16.mxu0 %v850
    %2625 = vmatmul.mubr.bf16.gmra.mxu0 %v849
    %v2626 = vpop.f32.mrf.mxu0
    %v2627 = vadd.f32 %v2586, %v2626
    %v2628 = vpop.f32.mrf.mxu0
    %v2629 = vadd.f32 %v2588, %v2628
    %v2630 = vpop.f32.mrf.mxu0
    %v2631 = vpop.f32.mrf.mxu0
    %2632 = vdwg.mxu0
    %2633 = vmatprep.subr.bf16.mxu0 %v1938
    %2634 = vmatpush1.bf16.msra.mxu0 %v1937
    %2635 = vmatprep.subr.bf16.mxu0 %v1930
    %2636 = vmatpush1.bf16.msra.mxu0 %v1929
    %2637 = vmatprep.subr.bf16.mxu0 %v1922
    %2638 = vmatpush1.bf16.msra.mxu0 %v1921
    %2639 = vmatprep.subr.bf16.mxu0 %v1914
    %2640 = vmatpush1.bf16.msra.mxu0 %v1913
    %2641 = vmatprep.subr.bf16.mxu0 %v1906
    %2642 = vmatpush1.bf16.msra.mxu0 %v1905
    %2643 = vmatprep.subr.bf16.mxu0 %v1898
    %2644 = vmatpush1.bf16.msra.mxu0 %v1897
    %2645 = vmatprep.subr.bf16.mxu0 %v1890
    %2646 = vmatpush1.bf16.msra.mxu0 %v1889
    %2647 = vmatprep.subr.bf16.mxu0 %v1882
    %2648 = vmatpush1.bf16.msra.mxu0 %v1881
    %2649 = vmatprep.subr.bf16.mxu0 %v2002
    %2650 = vmatpush2.bf16.msra.mxu0 %v2001
    %2651 = vmatprep.subr.bf16.mxu0 %v1994
    %2652 = vmatpush2.bf16.msra.mxu0 %v1993
    %2653 = vmatprep.subr.bf16.mxu0 %v1986
    %2654 = vmatpush2.bf16.msra.mxu0 %v1985
    %2655 = vmatprep.subr.bf16.mxu0 %v1978
    %2656 = vmatpush2.bf16.msra.mxu0 %v1977
    %2657 = vmatprep.subr.bf16.mxu0 %v1970
    %2658 = vmatpush2.bf16.msra.mxu0 %v1969
    %2659 = vmatprep.subr.bf16.mxu0 %v1962
    %2660 = vmatpush2.bf16.msra.mxu0 %v1961
    %2661 = vmatprep.subr.bf16.mxu0 %v1954
    %2662 = vmatpush2.bf16.msra.mxu0 %v1953
    %2663 = vmatprep.subr.bf16.mxu0 %v1946
    %2664 = vmatpush2.bf16.msra.mxu0 %v1945
    %2665 = vmatprep.mubr.bf16.mxu0 %v848
    %2666 = vmatmul.mubr.bf16.gmra.mxu0 %v847
    %v2667 = vpop.f32.mrf.mxu0
    %v2668 = vadd.f32 0.0, %v2667
    %v2669 = vpop.f32.mrf.mxu0
    %v2670 = vadd.f32 0.0, %v2669
    %v2671 = vpop.f32.mrf.mxu0
    %v2672 = vpop.f32.mrf.mxu0
    %2673 = vdwg.mxu0
    %2674 = vmatprep.subr.bf16.mxu0 %v2066
    %2675 = vmatpush1.bf16.msra.mxu0 %v2065
    %2676 = vmatprep.subr.bf16.mxu0 %v2058
    %2677 = vmatpush1.bf16.msra.mxu0 %v2057
    %2678 = vmatprep.subr.bf16.mxu0 %v2050
    %2679 = vmatpush1.bf16.msra.mxu0 %v2049
    %2680 = vmatprep.subr.bf16.mxu0 %v2042
    %2681 = vmatpush1.bf16.msra.mxu0 %v2041
    %2682 = vmatprep.subr.bf16.mxu0 %v2034
    %2683 = vmatpush1.bf16.msra.mxu0 %v2033
    %2684 = vmatprep.subr.bf16.mxu0 %v2026
    %2685 = vmatpush1.bf16.msra.mxu0 %v2025
    %2686 = vmatprep.subr.bf16.mxu0 %v2018
    %2687 = vmatpush1.bf16.msra.mxu0 %v2017
    %2688 = vmatprep.subr.bf16.mxu0 %v2010
    %2689 = vmatpush1.bf16.msra.mxu0 %v2009
    %2690 = vmatprep.subr.bf16.mxu0 %v2130
    %2691 = vmatpush2.bf16.msra.mxu0 %v2129
    %2692 = vmatprep.subr.bf16.mxu0 %v2122
    %2693 = vmatpush2.bf16.msra.mxu0 %v2121
    %2694 = vmatprep.subr.bf16.mxu0 %v2114
    %2695 = vmatpush2.bf16.msra.mxu0 %v2113
    %2696 = vmatprep.subr.bf16.mxu0 %v2106
    %2697 = vmatpush2.bf16.msra.mxu0 %v2105
    %2698 = vmatprep.subr.bf16.mxu0 %v2098
    %2699 = vmatpush2.bf16.msra.mxu0 %v2097
    %2700 = vmatprep.subr.bf16.mxu0 %v2090
    %2701 = vmatpush2.bf16.msra.mxu0 %v2089
    %2702 = vmatprep.subr.bf16.mxu0 %v2082
    %2703 = vmatpush2.bf16.msra.mxu0 %v2081
    %2704 = vmatprep.subr.bf16.mxu0 %v2074
    %2705 = vmatpush2.bf16.msra.mxu0 %v2073
    %2706 = vmatprep.mubr.bf16.mxu0 %v850
    %2707 = vmatmul.mubr.bf16.gmra.mxu0 %v849
    %v2708 = vpop.f32.mrf.mxu0
    %v2709 = vadd.f32 %v2668, %v2708
    %v2710 = vpop.f32.mrf.mxu0
    %v2711 = vadd.f32 %v2670, %v2710
    %v2712 = vpop.f32.mrf.mxu0
    %v2713 = vpop.f32.mrf.mxu0
    %2714 = vdwg.mxu0
    %v2715 = vmax.f32 %v2463, %v2545
    %v2716 = vmax.f32 %v2465, %v2547
    %v2717 = vmax.f32 %v2627, %v2709
    %v2718 = vmax.f32 %v2629, %v2711
    %v2719 = vmax.f32 %v2715, %v2717
    %v2720 = vmax.f32 %v2716, %v2718
    %v2721 = vld [vmem:[%s4] sm:$0x3]
    %v2723 = vlaneseq
    %v2724 = vshrl.u32 %v2723, 7
    %v2725 = vsub.s32 0, %v2724
    %v2726 = vrot.slane %v2721, %v2725
    %v2727 = vlaneseq
    %v2728 = vshrl.u32 %v2727, 7
    %v2729 = vsub.s32 1, %v2728
    %v2730 = vrot.slane %v2721, %v2729
    %v2733 = vadd.f32 %v2719, %v2726
    %v2734 = vadd.f32 %v2720, %v2730
    %v2735 = vmax.f32 %v2733, 0.0
    %v2736 = vmax.f32 %v2734, 0.0
    %v2737 = vpack.c.bf16 %v2735, %v2735
    %v2738 = vpack.c.bf16 %v2736, %v2736
    %v2739 = vld [vmem:[#allocation6] sm:$0xff]
    %v2740 = vld [vmem:[#allocation6 + $0x8] sm:$0xff]
    %v2741 = vld [vmem:[#allocation6 + $0x10] sm:$0xff]
    %v2742 = vld [vmem:[#allocation6 + $0x18] sm:$0xff]
    %v2743 = vld [vmem:[#allocation6 + $0x20] sm:$0xff]
    %v2744 = vld [vmem:[#allocation6 + $0x28] sm:$0xff]
    %v2745 = vld [vmem:[#allocation6 + $0x30] sm:$0xff]
    %v2746 = vld [vmem:[#allocation6 + $0x38] sm:$0xff]
    %v2747 = vld [vmem:[#allocation6 + $0x40] sm:$0xff]
    %v2748 = vld [vmem:[#allocation6 + $0x48] sm:$0xff]
    %v2749 = vld [vmem:[#allocation6 + $0x50] sm:$0xff]
    %v2750 = vld [vmem:[#allocation6 + $0x58] sm:$0xff]
    %v2751 = vld [vmem:[#allocation6 + $0x60] sm:$0xff]
    %v2752 = vld [vmem:[#allocation6 + $0x68] sm:$0xff]
    %v2753 = vld [vmem:[#allocation6 + $0x70] sm:$0xff]
    %v2754 = vld [vmem:[#allocation6 + $0x78] sm:$0xff]
    %v2755 = vld [vmem:[#allocation6 + $0x80] sm:$0xff]
    %v2756 = vld [vmem:[#allocation6 + $0x88] sm:$0xff]
    %v2757 = vld [vmem:[#allocation6 + $0x90] sm:$0xff]
    %v2758 = vld [vmem:[#allocation6 + $0x98] sm:$0xff]
    %v2759 = vld [vmem:[#allocation6 + $0xa0] sm:$0xff]
    %v2760 = vld [vmem:[#allocation6 + $0xa8] sm:$0xff]
    %v2761 = vld [vmem:[#allocation6 + $0xb0] sm:$0xff]
    %v2762 = vld [vmem:[#allocation6 + $0xb8] sm:$0xff]
    %v2763 = vld [vmem:[#allocation6 + $0xc0] sm:$0xff]
    %v2764 = vld [vmem:[#allocation6 + $0xc8] sm:$0xff]
    %v2765 = vld [vmem:[#allocation6 + $0xd0] sm:$0xff]
    %v2766 = vld [vmem:[#allocation6 + $0xd8] sm:$0xff]
    %v2767 = vld [vmem:[#allocation6 + $0xe0] sm:$0xff]
    %v2768 = vld [vmem:[#allocation6 + $0xe8] sm:$0xff]
    %v2769 = vld [vmem:[#allocation6 + $0xf0] sm:$0xff]
    %v2770 = vld [vmem:[#allocation6 + $0xf8] sm:$0xff]
    %v2771 = vld [vmem:[#allocation6 + $0x100] sm:$0xff]
    %v2772 = vld [vmem:[#allocation6 + $0x108] sm:$0xff]
    %v2773 = vld [vmem:[#allocation6 + $0x110] sm:$0xff]
    %v2774 = vld [vmem:[#allocation6 + $0x118] sm:$0xff]
    %v2775 = vld [vmem:[#allocation6 + $0x120] sm:$0xff]
    %v2776 = vld [vmem:[#allocation6 + $0x128] sm:$0xff]
    %v2777 = vld [vmem:[#allocation6 + $0x130] sm:$0xff]
    %v2778 = vld [vmem:[#allocation6 + $0x138] sm:$0xff]
    %v2779 = vld [vmem:[#allocation6 + $0x140] sm:$0xff]
    %v2780 = vld [vmem:[#allocation6 + $0x148] sm:$0xff]
    %v2781 = vld [vmem:[#allocation6 + $0x150] sm:$0xff]
    %v2782 = vld [vmem:[#allocation6 + $0x158] sm:$0xff]
    %v2783 = vld [vmem:[#allocation6 + $0x160] sm:$0xff]
    %v2784 = vld [vmem:[#allocation6 + $0x168] sm:$0xff]
    %v2785 = vld [vmem:[#allocation6 + $0x170] sm:$0xff]
    %v2786 = vld [vmem:[#allocation6 + $0x178] sm:$0xff]
    %v2787 = vld [vmem:[#allocation6 + $0x180] sm:$0xff]
    %v2788 = vld [vmem:[#allocation6 + $0x188] sm:$0xff]
    %v2789 = vld [vmem:[#allocation6 + $0x190] sm:$0xff]
    %v2790 = vld [vmem:[#allocation6 + $0x198] sm:$0xff]
    %v2791 = vld [vmem:[#allocation6 + $0x1a0] sm:$0xff]
    %v2792 = vld [vmem:[#allocation6 + $0x1a8] sm:$0xff]
    %v2793 = vld [vmem:[#allocation6 + $0x1b0] sm:$0xff]
    %v2794 = vld [vmem:[#allocation6 + $0x1b8] sm:$0xff]
    %v2795 = vld [vmem:[#allocation6 + $0x1c0] sm:$0xff]
    %v2796 = vld [vmem:[#allocation6 + $0x1c8] sm:$0xff]
    %v2797 = vld [vmem:[#allocation6 + $0x1d0] sm:$0xff]
    %v2798 = vld [vmem:[#allocation6 + $0x1d8] sm:$0xff]
    %v2799 = vld [vmem:[#allocation6 + $0x1e0] sm:$0xff]
    %v2800 = vld [vmem:[#allocation6 + $0x1e8] sm:$0xff]
    %v2801 = vld [vmem:[#allocation6 + $0x1f0] sm:$0xff]
    %v2802 = vld [vmem:[#allocation6 + $0x1f8] sm:$0xff]
    %v2867 = vunpack.c.l.b16 %v2739
    %v2868 = vunpack.c.h.b16 %v2739
    %v2869 = vunpack.c.l.b16 %v2740
    %v2870 = vunpack.c.h.b16 %v2740
    %v2871 = vunpack.c.l.b16 %v2741
    %v2872 = vunpack.c.h.b16 %v2741
    %v2873 = vunpack.c.l.b16 %v2742
    %v2874 = vunpack.c.h.b16 %v2742
    %v2875 = vunpack.c.l.b16 %v2743
    %v2876 = vunpack.c.h.b16 %v2743
    %v2877 = vunpack.c.l.b16 %v2744
    %v2878 = vunpack.c.h.b16 %v2744
    %v2879 = vunpack.c.l.b16 %v2745
    %v2880 = vunpack.c.h.b16 %v2745
    %v2881 = vunpack.c.l.b16 %v2746
    %v2882 = vunpack.c.h.b16 %v2746
    %v2883 = vunpack.c.l.b16 %v2747
    %v2884 = vunpack.c.h.b16 %v2747
    %v2885 = vunpack.c.l.b16 %v2748
    %v2886 = vunpack.c.h.b16 %v2748
    %v2887 = vunpack.c.l.b16 %v2749
    %v2888 = vunpack.c.h.b16 %v2749
    %v2889 = vunpack.c.l.b16 %v2750
    %v2890 = vunpack.c.h.b16 %v2750
    %v2891 = vunpack.c.l.b16 %v2751
    %v2892 = vunpack.c.h.b16 %v2751
    %v2893 = vunpack.c.l.b16 %v2752
    %v2894 = vunpack.c.h.b16 %v2752
    %v2895 = vunpack.c.l.b16 %v2753
    %v2896 = vunpack.c.h.b16 %v2753
    %v2897 = vunpack.c.l.b16 %v2754
    %v2898 = vunpack.c.h.b16 %v2754
    %v2899 = vunpack.c.l.b16 %v2755
    %v2900 = vunpack.c.h.b16 %v2755
    %v2901 = vunpack.c.l.b16 %v2756
    %v2902 = vunpack.c.h.b16 %v2756
    %v2903 = vunpack.c.l.b16 %v2757
    %v2904 = vunpack.c.h.b16 %v2757
    %v2905 = vunpack.c.l.b16 %v2758
    %v2906 = vunpack.c.h.b16 %v2758
    %v2907 = vunpack.c.l.b16 %v2759
    %v2908 = vunpack.c.h.b16 %v2759
    %v2909 = vunpack.c.l.b16 %v2760
    %v2910 = vunpack.c.h.b16 %v2760
    %v2911 = vunpack.c.l.b16 %v2761
    %v2912 = vunpack.c.h.b16 %v2761
    %v2913 = vunpack.c.l.b16 %v2762
    %v2914 = vunpack.c.h.b16 %v2762
    %v2915 = vunpack.c.l.b16 %v2763
    %v2916 = vunpack.c.h.b16 %v2763
    %v2917 = vunpack.c.l.b16 %v2764
    %v2918 = vunpack.c.h.b16 %v2764
    %v2919 = vunpack.c.l.b16 %v2765
    %v2920 = vunpack.c.h.b16 %v2765
    %v2921 = vunpack.c.l.b16 %v2766
    %v2922 = vunpack.c.h.b16 %v2766
    %v2923 = vunpack.c.l.b16 %v2767
    %v2924 = vunpack.c.h.b16 %v2767
    %v2925 = vunpack.c.l.b16 %v2768
    %v2926 = vunpack.c.h.b16 %v2768
    %v2927 = vunpack.c.l.b16 %v2769
    %v2928 = vunpack.c.h.b16 %v2769
    %v2929 = vunpack.c.l.b16 %v2770
    %v2930 = vunpack.c.h.b16 %v2770
    %v2931 = vunpack.c.l.b16 %v2771
    %v2932 = vunpack.c.h.b16 %v2771
    %v2933 = vunpack.c.l.b16 %v2772
    %v2934 = vunpack.c.h.b16 %v2772
    %v2935 = vunpack.c.l.b16 %v2773
    %v2936 = vunpack.c.h.b16 %v2773
    %v2937 = vunpack.c.l.b16 %v2774
    %v2938 = vunpack.c.h.b16 %v2774
    %v2939 = vunpack.c.l.b16 %v2775
    %v2940 = vunpack.c.h.b16 %v2775
    %v2941 = vunpack.c.l.b16 %v2776
    %v2942 = vunpack.c.h.b16 %v2776
    %v2943 = vunpack.c.l.b16 %v2777
    %v2944 = vunpack.c.h.b16 %v2777
    %v2945 = vunpack.c.l.b16 %v2778
    %v2946 = vunpack.c.h.b16 %v2778
    %v2947 = vunpack.c.l.b16 %v2779
    %v2948 = vunpack.c.h.b16 %v2779
    %v2949 = vunpack.c.l.b16 %v2780
    %v2950 = vunpack.c.h.b16 %v2780
    %v2951 = vunpack.c.l.b16 %v2781
    %v2952 = vunpack.c.h.b16 %v2781
    %v2953 = vunpack.c.l.b16 %v2782
    %v2954 = vunpack.c.h.b16 %v2782
    %v2955 = vunpack.c.l.b16 %v2783
    %v2956 = vunpack.c.h.b16 %v2783
    %v2957 = vunpack.c.l.b16 %v2784
    %v2958 = vunpack.c.h.b16 %v2784
    %v2959 = vunpack.c.l.b16 %v2785
    %v2960 = vunpack.c.h.b16 %v2785
    %v2961 = vunpack.c.l.b16 %v2786
    %v2962 = vunpack.c.h.b16 %v2786
    %v2963 = vunpack.c.l.b16 %v2787
    %v2964 = vunpack.c.h.b16 %v2787
    %v2965 = vunpack.c.l.b16 %v2788
    %v2966 = vunpack.c.h.b16 %v2788
    %v2967 = vunpack.c.l.b16 %v2789
    %v2968 = vunpack.c.h.b16 %v2789
    %v2969 = vunpack.c.l.b16 %v2790
    %v2970 = vunpack.c.h.b16 %v2790
    %v2971 = vunpack.c.l.b16 %v2791
    %v2972 = vunpack.c.h.b16 %v2791
    %v2973 = vunpack.c.l.b16 %v2792
    %v2974 = vunpack.c.h.b16 %v2792
    %v2975 = vunpack.c.l.b16 %v2793
    %v2976 = vunpack.c.h.b16 %v2793
    %v2977 = vunpack.c.l.b16 %v2794
    %v2978 = vunpack.c.h.b16 %v2794
    %v2979 = vunpack.c.l.b16 %v2795
    %v2980 = vunpack.c.h.b16 %v2795
    %v2981 = vunpack.c.l.b16 %v2796
    %v2982 = vunpack.c.h.b16 %v2796
    %v2983 = vunpack.c.l.b16 %v2797
    %v2984 = vunpack.c.h.b16 %v2797
    %v2985 = vunpack.c.l.b16 %v2798
    %v2986 = vunpack.c.h.b16 %v2798
    %v2987 = vunpack.c.l.b16 %v2799
    %v2988 = vunpack.c.h.b16 %v2799
    %v2989 = vunpack.c.l.b16 %v2800
    %v2990 = vunpack.c.h.b16 %v2800
    %v2991 = vunpack.c.l.b16 %v2801
    %v2992 = vunpack.c.h.b16 %v2801
    %v2993 = vunpack.c.l.b16 %v2802
    %v2994 = vunpack.c.h.b16 %v2802
    %v2995 = vpack.c.b16 %v2871, %v2867
    %v2996 = vpack.c.b16 %v2872, %v2868
    %v2997 = vpack.c.b16 %v2873, %v2869
    %v2998 = vpack.c.b16 %v2874, %v2870
    %v2999 = vpack.c.b16 %v2879, %v2875
    %v3000 = vpack.c.b16 %v2880, %v2876
    %v3001 = vpack.c.b16 %v2881, %v2877
    %v3002 = vpack.c.b16 %v2882, %v2878
    %v3003 = vpack.c.b16 %v2887, %v2883
    %v3004 = vpack.c.b16 %v2888, %v2884
    %v3005 = vpack.c.b16 %v2889, %v2885
    %v3006 = vpack.c.b16 %v2890, %v2886
    %v3007 = vpack.c.b16 %v2895, %v2891
    %v3008 = vpack.c.b16 %v2896, %v2892
    %v3009 = vpack.c.b16 %v2897, %v2893
    %v3010 = vpack.c.b16 %v2898, %v2894
    %v3011 = vpack.c.b16 %v2903, %v2899
    %v3012 = vpack.c.b16 %v2904, %v2900
    %v3013 = vpack.c.b16 %v2905, %v2901
    %v3014 = vpack.c.b16 %v2906, %v2902
    %v3015 = vpack.c.b16 %v2911, %v2907
    %v3016 = vpack.c.b16 %v2912, %v2908
    %v3017 = vpack.c.b16 %v2913, %v2909
    %v3018 = vpack.c.b16 %v2914, %v2910
    %v3019 = vpack.c.b16 %v2919, %v2915
    %v3020 = vpack.c.b16 %v2920, %v2916
    %v3021 = vpack.c.b16 %v2921, %v2917
    %v3022 = vpack.c.b16 %v2922, %v2918
    %v3023 = vpack.c.b16 %v2927, %v2923
    %v3024 = vpack.c.b16 %v2928, %v2924
    %v3025 = vpack.c.b16 %v2929, %v2925
    %v3026 = vpack.c.b16 %v2930, %v2926
    %v3027 = vpack.c.b16 %v2935, %v2931
    %v3028 = vpack.c.b16 %v2936, %v2932
    %v3029 = vpack.c.b16 %v2937, %v2933
    %v3030 = vpack.c.b16 %v2938, %v2934
    %v3031 = vpack.c.b16 %v2943, %v2939
    %v3032 = vpack.c.b16 %v2944, %v2940
    %v3033 = vpack.c.b16 %v2945, %v2941
    %v3034 = vpack.c.b16 %v2946, %v2942
    %v3035 = vpack.c.b16 %v2951, %v2947
    %v3036 = vpack.c.b16 %v2952, %v2948
    %v3037 = vpack.c.b16 %v2953, %v2949
    %v3038 = vpack.c.b16 %v2954, %v2950
    %v3039 = vpack.c.b16 %v2959, %v2955
    %v3040 = vpack.c.b16 %v2960, %v2956
    %v3041 = vpack.c.b16 %v2961, %v2957
    %v3042 = vpack.c.b16 %v2962, %v2958
    %v3043 = vpack.c.b16 %v2967, %v2963
    %v3044 = vpack.c.b16 %v2968, %v2964
    %v3045 = vpack.c.b16 %v2969, %v2965
    %v3046 = vpack.c.b16 %v2970, %v2966
    %v3047 = vpack.c.b16 %v2975, %v2971
    %v3048 = vpack.c.b16 %v2976, %v2972
    %v3049 = vpack.c.b16 %v2977, %v2973
    %v3050 = vpack.c.b16 %v2978, %v2974
    %v3051 = vpack.c.b16 %v2983, %v2979
    %v3052 = vpack.c.b16 %v2984, %v2980
    %v3053 = vpack.c.b16 %v2985, %v2981
    %v3054 = vpack.c.b16 %v2986, %v2982
    %v3055 = vpack.c.b16 %v2991, %v2987
    %v3056 = vpack.c.b16 %v2992, %v2988
    %v3057 = vpack.c.b16 %v2993, %v2989
    %v3058 = vpack.c.b16 %v2994, %v2990
    %3123 = vmatprep.subr.bf16.mxu0 %v3024
    %3124 = vmatpush1.bf16.msra.mxu0 %v3023
    %3125 = vmatprep.subr.bf16.mxu0 %v3020
    %3126 = vmatpush1.bf16.msra.mxu0 %v3019
    %3127 = vmatprep.subr.bf16.mxu0 %v3016
    %3128 = vmatpush1.bf16.msra.mxu0 %v3015
    %3129 = vmatprep.subr.bf16.mxu0 %v3012
    %3130 = vmatpush1.bf16.msra.mxu0 %v3011
    %3131 = vmatprep.subr.bf16.mxu0 %v3008
    %3132 = vmatpush1.bf16.msra.mxu0 %v3007
    %3133 = vmatprep.subr.bf16.mxu0 %v3004
    %3134 = vmatpush1.bf16.msra.mxu0 %v3003
    %3135 = vmatprep.subr.bf16.mxu0 %v3000
    %3136 = vmatpush1.bf16.msra.mxu0 %v2999
    %3137 = vmatprep.subr.bf16.mxu0 %v2996
    %3138 = vmatpush1.bf16.msra.mxu0 %v2995
    %3139 = vmatprep.subr.bf16.mxu0 %v3056
    %3140 = vmatpush2.bf16.msra.mxu0 %v3055
    %3141 = vmatprep.subr.bf16.mxu0 %v3052
    %3142 = vmatpush2.bf16.msra.mxu0 %v3051
    %3143 = vmatprep.subr.bf16.mxu0 %v3048
    %3144 = vmatpush2.bf16.msra.mxu0 %v3047
    %3145 = vmatprep.subr.bf16.mxu0 %v3044
    %3146 = vmatpush2.bf16.msra.mxu0 %v3043
    %3147 = vmatprep.subr.bf16.mxu0 %v3040
    %3148 = vmatpush2.bf16.msra.mxu0 %v3039
    %3149 = vmatprep.subr.bf16.mxu0 %v3036
    %3150 = vmatpush2.bf16.msra.mxu0 %v3035
    %3151 = vmatprep.subr.bf16.mxu0 %v3032
    %3152 = vmatpush2.bf16.msra.mxu0 %v3031
    %3153 = vmatprep.subr.bf16.mxu0 %v3028
    %3154 = vmatpush2.bf16.msra.mxu0 %v3027
    %3155 = vmatprep.mubr.bf16.mxu0 %v2738
    %3156 = vmatmul.mubr.bf16.gmra.mxu0 %v2737
    %v3157 = vpop.f32.mrf.mxu0
    %v3158 = vadd.f32 0.0, %v3157
    %v3159 = vpop.f32.mrf.mxu0
    %v3160 = vadd.f32 0.0, %v3159
    %v3161 = vpop.f32.mrf.mxu0
    %v3162 = vpop.f32.mrf.mxu0
    %3163 = vdwg.mxu0
    %3164 = vmatprep.subr.bf16.mxu0 %v3026
    %3165 = vmatpush1.bf16.msra.mxu0 %v3025
    %3166 = vmatprep.subr.bf16.mxu0 %v3022
    %3167 = vmatpush1.bf16.msra.mxu0 %v3021
    %3168 = vmatprep.subr.bf16.mxu0 %v3018
    %3169 = vmatpush1.bf16.msra.mxu0 %v3017
    %3170 = vmatprep.subr.bf16.mxu0 %v3014
    %3171 = vmatpush1.bf16.msra.mxu0 %v3013
    %3172 = vmatprep.subr.bf16.mxu0 %v3010
    %3173 = vmatpush1.bf16.msra.mxu0 %v3009
    %3174 = vmatprep.subr.bf16.mxu0 %v3006
    %3175 = vmatpush1.bf16.msra.mxu0 %v3005
    %3176 = vmatprep.subr.bf16.mxu0 %v3002
    %3177 = vmatpush1.bf16.msra.mxu0 %v3001
    %3178 = vmatprep.subr.bf16.mxu0 %v2998
    %3179 = vmatpush1.bf16.msra.mxu0 %v2997
    %3180 = vmatprep.subr.bf16.mxu0 %v3058
    %3181 = vmatpush2.bf16.msra.mxu0 %v3057
    %3182 = vmatprep.subr.bf16.mxu0 %v3054
    %3183 = vmatpush2.bf16.msra.mxu0 %v3053
    %3184 = vmatprep.subr.bf16.mxu0 %v3050
    %3185 = vmatpush2.bf16.msra.mxu0 %v3049
    %3186 = vmatprep.subr.bf16.mxu0 %v3046
    %3187 = vmatpush2.bf16.msra.mxu0 %v3045
    %3188 = vmatprep.subr.bf16.mxu0 %v3042
    %3189 = vmatpush2.bf16.msra.mxu0 %v3041
    %3190 = vmatprep.subr.bf16.mxu0 %v3038
    %3191 = vmatpush2.bf16.msra.mxu0 %v3037
    %3192 = vmatprep.subr.bf16.mxu0 %v3034
    %3193 = vmatpush2.bf16.msra.mxu0 %v3033
    %3194 = vmatprep.subr.bf16.mxu0 %v3030
    %3195 = vmatpush2.bf16.msra.mxu0 %v3029
    %3196 = vmatprep.mubr.bf16.mxu0 %v2738
    %3197 = vmatmul.mubr.bf16.gmra.mxu0 %v2737
    %v3198 = vpop.f32.mrf.mxu0
    %v3199 = vadd.f32 0.0, %v3198
    %v3200 = vpop.f32.mrf.mxu0
    %v3201 = vadd.f32 0.0, %v3200
    %v3202 = vpop.f32.mrf.mxu0
    %v3203 = vpop.f32.mrf.mxu0
    %3204 = vdwg.mxu0
    %v3205 = vmax.f32 %v3158, %v3160
    %v3206 = vmax.f32 %v3199, %v3201
    %v3207 = vmax.f32 %v3205, %v3206
    %v3208 = vld [vmem:[%s6] sm:$0x1]
    %v3210 = vlaneseq
    %v3211 = vshrl.u32 %v3210, 7
    %v3212 = vsub.s32 0, %v3211
    %v3213 = vrot.slane %v3208, %v3212
    %v3215 = vadd.f32 %v3207, %v3213
    %v3216 = vmax.f32 %v3215, 0.0
    %v3217 = vpack.c.bf16 %v3216, %v3216
    %v3218 = vld [vmem:[#allocation7] sm:$0xf]
    %v3219 = vld [vmem:[#allocation7 + $0x4] sm:$0xf]
    %v3220 = vld [vmem:[#allocation7 + $0x8] sm:$0xf]
    %v3221 = vld [vmem:[#allocation7 + $0xc] sm:$0xf]
    %v3222 = vld [vmem:[#allocation7 + $0x10] sm:$0xf]
    %v3223 = vld [vmem:[#allocation7 + $0x14] sm:$0xf]
    %v3224 = vld [vmem:[#allocation7 + $0x18] sm:$0xf]
    %v3225 = vld [vmem:[#allocation7 + $0x1c] sm:$0xf]
    %v3226 = vld [vmem:[#allocation7 + $0x20] sm:$0xf]
    %v3227 = vld [vmem:[#allocation7 + $0x24] sm:$0xf]
    %v3228 = vld [vmem:[#allocation7 + $0x28] sm:$0xf]
    %v3229 = vld [vmem:[#allocation7 + $0x2c] sm:$0xf]
    %v3230 = vld [vmem:[#allocation7 + $0x30] sm:$0xf]
    %v3231 = vld [vmem:[#allocation7 + $0x34] sm:$0xf]
    %v3232 = vld [vmem:[#allocation7 + $0x38] sm:$0xf]
    %v3233 = vld [vmem:[#allocation7 + $0x3c] sm:$0xf]
    %v3234 = vld [vmem:[%s8] sm:$0x1]
    %v3236 = vlaneseq
    %v3237 = vshrl.u32 %v3236, 7
    %v3238 = vsub.s32 0, %v3237
    %v3239 = vrot.slane %v3234, %v3238
    %v3257 = vunpack.c.l.b16 %v3218
    %v3258 = vunpack.c.l.b16 %v3219
    %v3259 = vunpack.c.l.b16 %v3220
    %v3260 = vunpack.c.l.b16 %v3221
    %v3261 = vunpack.c.l.b16 %v3222
    %v3262 = vunpack.c.l.b16 %v3223
    %v3263 = vunpack.c.l.b16 %v3224
    %v3264 = vunpack.c.l.b16 %v3225
    %v3265 = vunpack.c.l.b16 %v3226
    %v3266 = vunpack.c.l.b16 %v3227
    %v3267 = vunpack.c.l.b16 %v3228
    %v3268 = vunpack.c.l.b16 %v3229
    %v3269 = vunpack.c.l.b16 %v3230
    %v3270 = vunpack.c.l.b16 %v3231
    %v3271 = vunpack.c.l.b16 %v3232
    %v3272 = vunpack.c.l.b16 %v3233
    %v3273 = vpack.c.b16 %v3258, %v3257
    %v3274 = vpack.c.b16 %v3260, %v3259
    %v3275 = vpack.c.b16 %v3262, %v3261
    %v3276 = vpack.c.b16 %v3264, %v3263
    %v3277 = vpack.c.b16 %v3266, %v3265
    %v3278 = vpack.c.b16 %v3268, %v3267
    %v3279 = vpack.c.b16 %v3270, %v3269
    %v3280 = vpack.c.b16 %v3272, %v3271
    %3289 = vmatprep.subr.bf16.mxu0 0
    %3290 = vmatpush1.bf16.msra.mxu0 %v3280
    %3291 = vmatprep.subr.bf16.mxu0 0
    %3292 = vmatpush1.bf16.msra.mxu0 %v3279
    %3293 = vmatprep.subr.bf16.mxu0 0
    %3294 = vmatpush1.bf16.msra.mxu0 %v3278
    %3295 = vmatprep.subr.bf16.mxu0 0
    %3296 = vmatpush1.bf16.msra.mxu0 %v3277
    %3297 = vmatprep.subr.bf16.mxu0 0
    %3298 = vmatpush1.bf16.msra.mxu0 %v3276
    %3299 = vmatprep.subr.bf16.mxu0 0
    %3300 = vmatpush1.bf16.msra.mxu0 %v3275
    %3301 = vmatprep.subr.bf16.mxu0 0
    %3302 = vmatpush1.bf16.msra.mxu0 %v3274
    %3303 = vmatprep.subr.bf16.mxu0 0
    %3304 = vmatpush1.bf16.msra.mxu0 %v3273
    %3305 = vmatprep.subr.bf16.mxu0 0
    %3306 = vmatpush2.bf16.msra.mxu0 0
    %3307 = vmatprep.subr.bf16.mxu0 0
    %3308 = vmatpush2.bf16.msra.mxu0 0
    %3309 = vmatprep.subr.bf16.mxu0 0
    %3310 = vmatpush2.bf16.msra.mxu0 0
    %3311 = vmatprep.subr.bf16.mxu0 0
    %3312 = vmatpush2.bf16.msra.mxu0 0
    %3313 = vmatprep.subr.bf16.mxu0 0
    %3314 = vmatpush2.bf16.msra.mxu0 0
    %3315 = vmatprep.subr.bf16.mxu0 0
    %3316 = vmatpush2.bf16.msra.mxu0 0
    %3317 = vmatprep.subr.bf16.mxu0 0
    %3318 = vmatpush2.bf16.msra.mxu0 0
    %3319 = vmatprep.subr.bf16.mxu0 0
    %3320 = vmatpush2.bf16.msra.mxu0 0
    %3321 = vmatprep.mubr.bf16.mxu0 0
    %3322 = vmatmul.mubr.bf16.gmra.mxu0 %v3217
    %v3323 = vpop.f32.mrf.mxu0
    %v3324 = vadd.f32 %v3239, %v3323
    %v3325 = vpop.f32.mrf.mxu0
    %v3326 = vpop.f32.mrf.mxu0
    %v3327 = vpop.f32.mrf.mxu0
    %3328 = vdwg.mxu0
    %3329 = vst [vmem:[%s9] sm:$0xff] %v3324
    // Predicated region
    $region54: #{audio_module_forward.1} parent=1 // pred_check
      _
    $region55: #{audio_module_forward.1} parent=1 // pred_check_branch
      %3331 = sbr.rel (0) target = $region57
    $region56: #{audio_module_forward.1} parent=1 // pred_region
      _
    $region57: #{audio_module_forward.1} parent=1 // pred_fallthru
      _
    // Predicated region
    $region58: #{audio_module_forward.1} parent=1 // pred_check
      _
    $region59: #{audio_module_forward.1} parent=1 // pred_check_branch
      %3333 = sbr.rel (0) target = $region61
    $region60: #{audio_module_forward.1} parent=1 // pred_region
      _
    $region61: #{audio_module_forward.1} parent=1 // pred_fallthru
      _
    %3334 = vsyncpa [#allocation3], 1
    %3335 = vsyncpa [#allocation5], 1
    %3336 = vsyncpa [#allocation8], 1

</llo_original>
